<compile_context>
chip_gen: v7x
topology: tpu7x:2x2x1
jax: 0.10.0
libtpu: 0.0.40
codegen_flags: <defaults>
</compile_context>

<pallas_src>
import jax
import jax.numpy as jnp
from jax import lax
from jax.experimental import pallas as pl
from jax.experimental.pallas import tpu as pltpu

# ----- model hyper-parameters (synthetic, small) -----
STATE_DIM = 32          # dim
HIDDEN = 64             # dim_hidden
INNER = HIDDEN * 2      # dim_inner = dim_hidden * expansion_factor
DEPTH = 6               # mlp_depth
B = 16                  # batch
LN_EPS = 1e-5           # torch.nn.LayerNorm default eps
LANES = 128             # packed-parameter buffer lane width (TPU vreg lanes)

# ----- packed-parameter layout (row offsets into the (TOTAL_ROWS, 128) buffer) -----
# Vector table first (one vector per row), then the matrices at 8-aligned offsets.
ROW_B0 = 0                       # (1, HIDDEN)
ROW_G0 = 1                       # (1, HIDDEN)
ROW_B1 = 2                       # DEPTH rows, (1, INNER) each
ROW_G1 = ROW_B1 + DEPTH          # 8
ROW_B2 = ROW_G1 + DEPTH          # 14
ROW_G2 = ROW_B2 + DEPTH          # 20
ROW_MIX = ROW_G2 + DEPTH         # 26
ROW_WO = ROW_MIX + DEPTH         # 32  (proj_out weight as a (1, HIDDEN) row)
ROW_BO = ROW_WO + 1              # 33  (proj_out bias at lane 0)
VEC_ROWS = 40                    # vector table padded to a multiple of 8

ROW_W0 = VEC_ROWS                        # (STATE_DIM, HIDDEN)   rows 40..71
ROW_W1 = ROW_W0 + STATE_DIM              # DEPTH * (HIDDEN, INNER) rows 72..455
ROW_W2 = ROW_W1 + DEPTH * HIDDEN         # DEPTH * (INNER, HIDDEN) rows 456..1183
TOTAL_ROWS = ROW_W2 + DEPTH * INNER      # 1224 (multiple of 8); ~612 KiB f32


def _relu_sq(x):
    # ReluSquared: sign(x) * relu(x)**2  ==  relu(x)**2
    return jnp.square(jnp.maximum(x, 0.0))


def _layernorm_fast(x, g):
    # LayerNorm(bias=False) with independent reductions:
    # var = E[x^2] - mean^2 (biased variance, matches torch default).
    n = x.shape[-1]
    inv_n = 1.0 / n
    s1 = jnp.sum(x, axis=-1, keepdims=True)
    s2 = jnp.sum(x * x, axis=-1, keepdims=True)
    mean = s1 * inv_n
    var = s2 * inv_n - mean * mean
    return (x - mean) * lax.rsqrt(var + LN_EPS) * g


def critic_kernel(x_ref, p_ref, out_ref):
    x = x_ref[...]                                            # (TB, STATE_DIM)

    def vec(row, width):
        # one parameter vector as a (1, width) block (broadcasts over batch rows)
        return p_ref[row:row + 1, 0:width]

    # proj_in: Linear -> ReluSquared -> LayerNorm(bias=False)
    w0 = p_ref[ROW_W0:ROW_W0 + STATE_DIM, 0:HIDDEN]           # (STATE_DIM, HIDDEN)
    h = jnp.dot(x, w0, preferred_element_type=jnp.float32) + vec(ROW_B0, HIDDEN)
    h = _layernorm_fast(_relu_sq(h), vec(ROW_G0, HIDDEN))

    # BroNet residual blocks (static unroll over depth = 6)
    for d in range(DEPTH):
        w1 = p_ref[ROW_W1 + d * HIDDEN:ROW_W1 + (d + 1) * HIDDEN, :]         # (HIDDEN, INNER)
        z = jnp.dot(h, w1, preferred_element_type=jnp.float32) + vec(ROW_B1 + d, INNER)
        z = _layernorm_fast(_relu_sq(z), vec(ROW_G1 + d, INNER))             # Dropout(0.0) no-op
        w2 = p_ref[ROW_W2 + d * INNER:ROW_W2 + (d + 1) * INNER, 0:HIDDEN]    # (INNER, HIDDEN)
        z = jnp.dot(z, w2, preferred_element_type=jnp.float32) + vec(ROW_B2 + d, HIDDEN)
        z = _layernorm_fast(z, vec(ROW_G2 + d, HIDDEN))                      # weight init 1e-5
        h = h * vec(ROW_MIX + d, HIDDEN) + z                                 # learned mixer residual

    # proj_out: Linear(hidden, 1) as VPU multiply + lane reduction (skip N=1 MXU matmul)
    wo_row = vec(ROW_WO, HIDDEN)                              # (1, HIDDEN)
    bo = vec(ROW_BO, 1)                                       # (1, 1)
    out_ref[...] = jnp.sum(h * wo_row, axis=-1, keepdims=True) + bo


def critic_forward(x, packed_params):
    b = x.shape[0]
    tb = b                    # whole batch in a single grid step (latency-bound kernel)
    grid = (b // tb,)
    return pl.pallas_call(
        critic_kernel,
        out_shape=jax.ShapeDtypeStruct((b, 1), jnp.float32),
        grid=grid,
        in_specs=[
            pl.BlockSpec((tb, STATE_DIM), lambda i: (i, 0)),
            pl.BlockSpec((TOTAL_ROWS, LANES), lambda i: (0, 0)),   # single packed param DMA
        ],
        out_specs=pl.BlockSpec((tb, 1), lambda i: (i, 0)),
        compiler_params=pltpu.CompilerParams(dimension_semantics=("arbitrary",)),
    )(x, packed_params)


def init_params(key):
    """Deterministic synthetic init matching the PyTorch module's shapes."""
    ks = jax.random.split(key, 3 + 4 * DEPTH)

    def lin_w(k, fan_in, shape):
        return jax.random.normal(k, shape, jnp.float32) / jnp.sqrt(float(fan_in))

    # proj_in
    w0 = lin_w(ks[0], STATE_DIM, (STATE_DIM, HIDDEN))
    b0 = jax.random.normal(ks[1], (1, HIDDEN), jnp.float32) * 0.01
    g0 = jnp.ones((1, HIDDEN), jnp.float32)                    # LayerNorm weight

    # residual blocks (stacked over depth)
    w1_l, b1_l, w2_l, b2_l = [], [], [], []
    for d in range(DEPTH):
        w1_l.append(lin_w(ks[3 + 4 * d + 0], HIDDEN, (HIDDEN, INNER)))
        b1_l.append(jax.random.normal(ks[3 + 4 * d + 1], (1, INNER), jnp.float32) * 0.01)
        w2_l.append(lin_w(ks[3 + 4 * d + 2], INNER, (INNER, HIDDEN)))
        b2_l.append(jax.random.normal(ks[3 + 4 * d + 3], (1, HIDDEN), jnp.float32) * 0.01)
    w1 = jnp.stack(w1_l)                                       # (DEPTH, HIDDEN, INNER)
    b1 = jnp.stack(b1_l)                                       # (DEPTH, 1, INNER)
    g1 = jnp.ones((DEPTH, 1, INNER), jnp.float32)              # inner LayerNorm weight
    w2 = jnp.stack(w2_l)                                       # (DEPTH, INNER, HIDDEN)
    b2 = jnp.stack(b2_l)                                       # (DEPTH, 1, HIDDEN)
    g2 = jnp.full((DEPTH, 1, HIDDEN), 1e-5, jnp.float32)       # nn.init.constant_(..., 1e-5)
    mix = jnp.ones((DEPTH, 1, HIDDEN), jnp.float32)            # learned mixers init to ones

    # proj_out
    wo = lin_w(ks[2], HIDDEN, (HIDDEN, 1))
    bo = jnp.zeros((1, 1), jnp.float32)

    return (w0, b0, g0, w1, b1, g1, w2, b2, g2, mix, wo, bo)


def pack_params(params):
    """Concatenate all parameters into one tile-aligned (TOTAL_ROWS, 128) f32 buffer."""
    (w0, b0, g0, w1, b1, g1, w2, b2, g2, mix, wo, bo) = params
    buf = jnp.zeros((TOTAL_ROWS, LANES), jnp.float32)
    buf = buf.at[ROW_B0, 0:HIDDEN].set(b0.reshape(HIDDEN))
    buf = buf.at[ROW_G0, 0:HIDDEN].set(g0.reshape(HIDDEN))
    buf = buf.at[ROW_B1:ROW_B1 + DEPTH, 0:INNER].set(b1.reshape(DEPTH, INNER))
    buf = buf.at[ROW_G1:ROW_G1 + DEPTH, 0:INNER].set(g1.reshape(DEPTH, INNER))
    buf = buf.at[ROW_B2:ROW_B2 + DEPTH, 0:HIDDEN].set(b2.reshape(DEPTH, HIDDEN))
    buf = buf.at[ROW_G2:ROW_G2 + DEPTH, 0:HIDDEN].set(g2.reshape(DEPTH, HIDDEN))
    buf = buf.at[ROW_MIX:ROW_MIX + DEPTH, 0:HIDDEN].set(mix.reshape(DEPTH, HIDDEN))
    buf = buf.at[ROW_WO, 0:HIDDEN].set(wo.reshape(HIDDEN))     # (HIDDEN,1) stored as a row
    buf = buf.at[ROW_BO, 0:1].set(bo.reshape(1))
    buf = buf.at[ROW_W0:ROW_W0 + STATE_DIM, 0:HIDDEN].set(w0)
    buf = buf.at[ROW_W1:ROW_W1 + DEPTH * HIDDEN, 0:INNER].set(w1.reshape(DEPTH * HIDDEN, INNER))
    buf = buf.at[ROW_W2:ROW_W2 + DEPTH * INNER, 0:HIDDEN].set(w2.reshape(DEPTH * INNER, HIDDEN))
    return buf


def critic_reference(x, params):
    """Pure-JAX reference mirroring the PyTorch forward (two-pass LayerNorm)."""
    (w0, b0, g0, w1, b1, g1, w2, b2, g2, mix, wo, bo) = params

    def ln(v, g):
        mean = jnp.mean(v, axis=-1, keepdims=True)
        var = jnp.mean(jnp.square(v - mean), axis=-1, keepdims=True)
        return (v - mean) * lax.rsqrt(var + LN_EPS) * g

    h = ln(_relu_sq(x @ w0 + b0), g0)
    for i in range(DEPTH):
        z = ln(_relu_sq(h @ w1[i] + b1[i]), g1[i])
        z = ln(z @ w2[i] + b2[i], g2[i])
        h = h * mix[i] + z
    return h @ wo + bo


if __name__ == "__main__":
    key = jax.random.PRNGKey(0)
    k_x, k_p = jax.random.split(key)
    x = jax.random.normal(k_x, (B, STATE_DIM), jnp.float32)
    params = init_params(k_p)
    packed = pack_params(params)

    out = critic_forward(x, packed)
    out = jax.block_until_ready(out)

    ref = critic_reference(x, params)
    assert out.shape == (B, 1)
    assert jnp.allclose(out, ref, atol=1e-4, rtol=1e-4), "kernel/reference mismatch"

    print("KERNEL_OK")
</pallas_src>

<mosaic_0001>
module attributes {stable_mosaic.version = 11 : i64} {
  func.func @critic_kernel(%arg0: i32, %arg1: memref<16x32xf32, #tpu.memory_space<vmem>>, %arg2: memref<1224x128xf32, #tpu.memory_space<vmem>>, %arg3: memref<16x1xf32, #tpu.memory_space<vmem>>) attributes {dimension_semantics = [#tpu.dimension_semantics<arbitrary>], iteration_bounds = array<i64: 1>, scalar_prefetch = 0 : i64, scratch_operands = 0 : i64, tpu.core_type = #tpu.core_type<tc>, window_params = [{transform_indices = @transform_0, window_bounds = array<i64: 16, 32>}, {pipeline_mode = #tpu.pipeline_mode<synchronous>, transform_indices = @transform_1, window_bounds = array<i64: 1224, 128>}, {transform_indices = @transform_2, window_bounds = array<i64: 16, 1>}]} {
    %c0 = arith.constant 0 : index
    %c0_0 = arith.constant 0 : index
    %0 = vector.load %arg1[%c0, %c0_0] : memref<16x32xf32, #tpu.memory_space<vmem>>, vector<16x32xf32>
    %c40 = arith.constant 40 : index
    %c0_1 = arith.constant 0 : index
    %1 = vector.load %arg2[%c40, %c0_1] : memref<1224x128xf32, #tpu.memory_space<vmem>>, vector<32x64xf32>
    %cst = arith.constant dense<0.000000e+00> : vector<16x64xf32>
    %2 = tpu.matmul %0, %1, %cst {dimension_numbers = #tpu.dot_dimension_numbers<[1], [0], [0], [1], [0, 0, 1, 1], [], []>} : vector<16x32xf32>, vector<32x64xf32>, vector<16x64xf32> -> vector<16x64xf32>
    %c0_2 = arith.constant 0 : index
    %c0_3 = arith.constant 0 : index
    %3 = vector.load %arg2[%c0_2, %c0_3] : memref<1224x128xf32, #tpu.memory_space<vmem>>, vector<1x64xf32>
    %4 = vector.broadcast %3 : vector<1x64xf32> to vector<16x64xf32>
    %5 = arith.addf %2, %4 : vector<16x64xf32>
    %cst_4 = arith.constant 0.000000e+00 : f32
    %6 = vector.broadcast %cst_4 : f32 to vector<16x64xf32>
    %7 = arith.maximumf %5, %6 : vector<16x64xf32>
    %8 = arith.mulf %7, %7 : vector<16x64xf32>
    %c1 = arith.constant 1 : index
    %c0_5 = arith.constant 0 : index
    %9 = vector.load %arg2[%c1, %c0_5] : memref<1224x128xf32, #tpu.memory_space<vmem>>, vector<1x64xf32>
    %cst_6 = arith.constant dense<0.000000e+00> : vector<16xf32>
    %10 = vector.multi_reduction <add>, %8, %cst_6 [1] : vector<16x64xf32> to vector<16xf32>
    %11 = vector.shape_cast %10 : vector<16xf32> to vector<16x1xf32>
    %12 = arith.mulf %8, %8 : vector<16x64xf32>
    %cst_7 = arith.constant dense<0.000000e+00> : vector<16xf32>
    %13 = vector.multi_reduction <add>, %12, %cst_7 [1] : vector<16x64xf32> to vector<16xf32>
    %14 = vector.shape_cast %13 : vector<16xf32> to vector<16x1xf32>
    %cst_8 = arith.constant 1.562500e-02 : f32
    %15 = vector.broadcast %cst_8 : f32 to vector<16x1xf32>
    %16 = arith.mulf %11, %15 : vector<16x1xf32>
    %cst_9 = arith.constant 1.562500e-02 : f32
    %17 = vector.broadcast %cst_9 : f32 to vector<16x1xf32>
    %18 = arith.mulf %14, %17 : vector<16x1xf32>
    %19 = arith.mulf %16, %16 : vector<16x1xf32>
    %20 = arith.subf %18, %19 : vector<16x1xf32>
    %21 = vector.broadcast %16 : vector<16x1xf32> to vector<16x64xf32>
    %22 = arith.subf %8, %21 : vector<16x64xf32>
    %cst_10 = arith.constant 9.99999974E-6 : f32
    %23 = vector.broadcast %cst_10 : f32 to vector<16x1xf32>
    %24 = arith.addf %20, %23 : vector<16x1xf32>
    %25 = math.rsqrt %24 : vector<16x1xf32>
    %26 = vector.broadcast %25 : vector<16x1xf32> to vector<16x64xf32>
    %27 = arith.mulf %22, %26 : vector<16x64xf32>
    %28 = vector.broadcast %9 : vector<1x64xf32> to vector<16x64xf32>
    %29 = arith.mulf %27, %28 : vector<16x64xf32>
    %c72 = arith.constant 72 : index
    %c0_11 = arith.constant 0 : index
    %30 = vector.load %arg2[%c72, %c0_11] : memref<1224x128xf32, #tpu.memory_space<vmem>>, vector<64x128xf32>
    %cst_12 = arith.constant dense<0.000000e+00> : vector<16x128xf32>
    %31 = tpu.matmul %29, %30, %cst_12 {dimension_numbers = #tpu.dot_dimension_numbers<[1], [0], [0], [1], [0, 0, 1, 1], [], []>} : vector<16x64xf32>, vector<64x128xf32>, vector<16x128xf32> -> vector<16x128xf32>
    %c2 = arith.constant 2 : index
    %c0_13 = arith.constant 0 : index
    %32 = vector.load %arg2[%c2, %c0_13] : memref<1224x128xf32, #tpu.memory_space<vmem>>, vector<1x128xf32>
    %33 = vector.broadcast %32 : vector<1x128xf32> to vector<16x128xf32>
    %34 = arith.addf %31, %33 : vector<16x128xf32>
    %cst_14 = arith.constant 0.000000e+00 : f32
    %35 = vector.broadcast %cst_14 : f32 to vector<16x128xf32>
    %36 = arith.maximumf %34, %35 : vector<16x128xf32>
    %37 = arith.mulf %36, %36 : vector<16x128xf32>
    %c8 = arith.constant 8 : index
    %c0_15 = arith.constant 0 : index
    %38 = vector.load %arg2[%c8, %c0_15] : memref<1224x128xf32, #tpu.memory_space<vmem>>, vector<1x128xf32>
    %cst_16 = arith.constant dense<0.000000e+00> : vector<16xf32>
    %39 = vector.multi_reduction <add>, %37, %cst_16 [1] : vector<16x128xf32> to vector<16xf32>
    %40 = vector.shape_cast %39 : vector<16xf32> to vector<16x1xf32>
    %41 = arith.mulf %37, %37 : vector<16x128xf32>
    %cst_17 = arith.constant dense<0.000000e+00> : vector<16xf32>
    %42 = vector.multi_reduction <add>, %41, %cst_17 [1] : vector<16x128xf32> to vector<16xf32>
    %43 = vector.shape_cast %42 : vector<16xf32> to vector<16x1xf32>
    %cst_18 = arith.constant 7.812500e-03 : f32
    %44 = vector.broadcast %cst_18 : f32 to vector<16x1xf32>
    %45 = arith.mulf %40, %44 : vector<16x1xf32>
    %cst_19 = arith.constant 7.812500e-03 : f32
    %46 = vector.broadcast %cst_19 : f32 to vector<16x1xf32>
    %47 = arith.mulf %43, %46 : vector<16x1xf32>
    %48 = arith.mulf %45, %45 : vector<16x1xf32>
    %49 = arith.subf %47, %48 : vector<16x1xf32>
    %50 = vector.broadcast %45 : vector<16x1xf32> to vector<16x128xf32>
    %51 = arith.subf %37, %50 : vector<16x128xf32>
    %cst_20 = arith.constant 9.99999974E-6 : f32
    %52 = vector.broadcast %cst_20 : f32 to vector<16x1xf32>
    %53 = arith.addf %49, %52 : vector<16x1xf32>
    %54 = math.rsqrt %53 : vector<16x1xf32>
    %55 = vector.broadcast %54 : vector<16x1xf32> to vector<16x128xf32>
    %56 = arith.mulf %51, %55 : vector<16x128xf32>
    %57 = vector.broadcast %38 : vector<1x128xf32> to vector<16x128xf32>
    %58 = arith.mulf %56, %57 : vector<16x128xf32>
    %c456 = arith.constant 456 : index
    %c0_21 = arith.constant 0 : index
    %59 = vector.load %arg2[%c456, %c0_21] : memref<1224x128xf32, #tpu.memory_space<vmem>>, vector<128x64xf32>
    %cst_22 = arith.constant dense<0.000000e+00> : vector<16x64xf32>
    %60 = tpu.matmul %58, %59, %cst_22 {dimension_numbers = #tpu.dot_dimension_numbers<[1], [0], [0], [1], [0, 0, 1, 1], [], []>} : vector<16x128xf32>, vector<128x64xf32>, vector<16x64xf32> -> vector<16x64xf32>
    %c14 = arith.constant 14 : index
    %c0_23 = arith.constant 0 : index
    %61 = vector.load %arg2[%c14, %c0_23] : memref<1224x128xf32, #tpu.memory_space<vmem>>, vector<1x64xf32>
    %62 = vector.broadcast %61 : vector<1x64xf32> to vector<16x64xf32>
    %63 = arith.addf %60, %62 : vector<16x64xf32>
    %c20 = arith.constant 20 : index
    %c0_24 = arith.constant 0 : index
    %64 = vector.load %arg2[%c20, %c0_24] : memref<1224x128xf32, #tpu.memory_space<vmem>>, vector<1x64xf32>
    %cst_25 = arith.constant dense<0.000000e+00> : vector<16xf32>
    %65 = vector.multi_reduction <add>, %63, %cst_25 [1] : vector<16x64xf32> to vector<16xf32>
    %66 = vector.shape_cast %65 : vector<16xf32> to vector<16x1xf32>
    %67 = arith.mulf %63, %63 : vector<16x64xf32>
    %cst_26 = arith.constant dense<0.000000e+00> : vector<16xf32>
    %68 = vector.multi_reduction <add>, %67, %cst_26 [1] : vector<16x64xf32> to vector<16xf32>
    %69 = vector.shape_cast %68 : vector<16xf32> to vector<16x1xf32>
    %cst_27 = arith.constant 1.562500e-02 : f32
    %70 = vector.broadcast %cst_27 : f32 to vector<16x1xf32>
    %71 = arith.mulf %66, %70 : vector<16x1xf32>
    %cst_28 = arith.constant 1.562500e-02 : f32
    %72 = vector.broadcast %cst_28 : f32 to vector<16x1xf32>
    %73 = arith.mulf %69, %72 : vector<16x1xf32>
    %74 = arith.mulf %71, %71 : vector<16x1xf32>
    %75 = arith.subf %73, %74 : vector<16x1xf32>
    %76 = vector.broadcast %71 : vector<16x1xf32> to vector<16x64xf32>
    %77 = arith.subf %63, %76 : vector<16x64xf32>
    %cst_29 = arith.constant 9.99999974E-6 : f32
    %78 = vector.broadcast %cst_29 : f32 to vector<16x1xf32>
    %79 = arith.addf %75, %78 : vector<16x1xf32>
    %80 = math.rsqrt %79 : vector<16x1xf32>
    %81 = vector.broadcast %80 : vector<16x1xf32> to vector<16x64xf32>
    %82 = arith.mulf %77, %81 : vector<16x64xf32>
    %83 = vector.broadcast %64 : vector<1x64xf32> to vector<16x64xf32>
    %84 = arith.mulf %82, %83 : vector<16x64xf32>
    %c26 = arith.constant 26 : index
    %c0_30 = arith.constant 0 : index
    %85 = vector.load %arg2[%c26, %c0_30] : memref<1224x128xf32, #tpu.memory_space<vmem>>, vector<1x64xf32>
    %86 = vector.broadcast %85 : vector<1x64xf32> to vector<16x64xf32>
    %87 = arith.mulf %29, %86 : vector<16x64xf32>
    %88 = arith.addf %87, %84 : vector<16x64xf32>
    %c136 = arith.constant 136 : index
    %c0_31 = arith.constant 0 : index
    %89 = vector.load %arg2[%c136, %c0_31] : memref<1224x128xf32, #tpu.memory_space<vmem>>, vector<64x128xf32>
    %cst_32 = arith.constant dense<0.000000e+00> : vector<16x128xf32>
    %90 = tpu.matmul %88, %89, %cst_32 {dimension_numbers = #tpu.dot_dimension_numbers<[1], [0], [0], [1], [0, 0, 1, 1], [], []>} : vector<16x64xf32>, vector<64x128xf32>, vector<16x128xf32> -> vector<16x128xf32>
    %c3 = arith.constant 3 : index
    %c0_33 = arith.constant 0 : index
    %91 = vector.load %arg2[%c3, %c0_33] : memref<1224x128xf32, #tpu.memory_space<vmem>>, vector<1x128xf32>
    %92 = vector.broadcast %91 : vector<1x128xf32> to vector<16x128xf32>
    %93 = arith.addf %90, %92 : vector<16x128xf32>
    %cst_34 = arith.constant 0.000000e+00 : f32
    %94 = vector.broadcast %cst_34 : f32 to vector<16x128xf32>
    %95 = arith.maximumf %93, %94 : vector<16x128xf32>
    %96 = arith.mulf %95, %95 : vector<16x128xf32>
    %c9 = arith.constant 9 : index
    %c0_35 = arith.constant 0 : index
    %97 = vector.load %arg2[%c9, %c0_35] : memref<1224x128xf32, #tpu.memory_space<vmem>>, vector<1x128xf32>
    %cst_36 = arith.constant dense<0.000000e+00> : vector<16xf32>
    %98 = vector.multi_reduction <add>, %96, %cst_36 [1] : vector<16x128xf32> to vector<16xf32>
    %99 = vector.shape_cast %98 : vector<16xf32> to vector<16x1xf32>
    %100 = arith.mulf %96, %96 : vector<16x128xf32>
    %cst_37 = arith.constant dense<0.000000e+00> : vector<16xf32>
    %101 = vector.multi_reduction <add>, %100, %cst_37 [1] : vector<16x128xf32> to vector<16xf32>
    %102 = vector.shape_cast %101 : vector<16xf32> to vector<16x1xf32>
    %cst_38 = arith.constant 7.812500e-03 : f32
    %103 = vector.broadcast %cst_38 : f32 to vector<16x1xf32>
    %104 = arith.mulf %99, %103 : vector<16x1xf32>
    %cst_39 = arith.constant 7.812500e-03 : f32
    %105 = vector.broadcast %cst_39 : f32 to vector<16x1xf32>
    %106 = arith.mulf %102, %105 : vector<16x1xf32>
    %107 = arith.mulf %104, %104 : vector<16x1xf32>
    %108 = arith.subf %106, %107 : vector<16x1xf32>
    %109 = vector.broadcast %104 : vector<16x1xf32> to vector<16x128xf32>
    %110 = arith.subf %96, %109 : vector<16x128xf32>
    %cst_40 = arith.constant 9.99999974E-6 : f32
    %111 = vector.broadcast %cst_40 : f32 to vector<16x1xf32>
    %112 = arith.addf %108, %111 : vector<16x1xf32>
    %113 = math.rsqrt %112 : vector<16x1xf32>
    %114 = vector.broadcast %113 : vector<16x1xf32> to vector<16x128xf32>
    %115 = arith.mulf %110, %114 : vector<16x128xf32>
    %116 = vector.broadcast %97 : vector<1x128xf32> to vector<16x128xf32>
    %117 = arith.mulf %115, %116 : vector<16x128xf32>
    %c584 = arith.constant 584 : index
    %c0_41 = arith.constant 0 : index
    %118 = vector.load %arg2[%c584, %c0_41] : memref<1224x128xf32, #tpu.memory_space<vmem>>, vector<128x64xf32>
    %cst_42 = arith.constant dense<0.000000e+00> : vector<16x64xf32>
    %119 = tpu.matmul %117, %118, %cst_42 {dimension_numbers = #tpu.dot_dimension_numbers<[1], [0], [0], [1], [0, 0, 1, 1], [], []>} : vector<16x128xf32>, vector<128x64xf32>, vector<16x64xf32> -> vector<16x64xf32>
    %c15 = arith.constant 15 : index
    %c0_43 = arith.constant 0 : index
    %120 = vector.load %arg2[%c15, %c0_43] : memref<1224x128xf32, #tpu.memory_space<vmem>>, vector<1x64xf32>
    %121 = vector.broadcast %120 : vector<1x64xf32> to vector<16x64xf32>
    %122 = arith.addf %119, %121 : vector<16x64xf32>
    %c21 = arith.constant 21 : index
    %c0_44 = arith.constant 0 : index
    %123 = vector.load %arg2[%c21, %c0_44] : memref<1224x128xf32, #tpu.memory_space<vmem>>, vector<1x64xf32>
    %cst_45 = arith.constant dense<0.000000e+00> : vector<16xf32>
    %124 = vector.multi_reduction <add>, %122, %cst_45 [1] : vector<16x64xf32> to vector<16xf32>
    %125 = vector.shape_cast %124 : vector<16xf32> to vector<16x1xf32>
    %126 = arith.mulf %122, %122 : vector<16x64xf32>
    %cst_46 = arith.constant dense<0.000000e+00> : vector<16xf32>
    %127 = vector.multi_reduction <add>, %126, %cst_46 [1] : vector<16x64xf32> to vector<16xf32>
    %128 = vector.shape_cast %127 : vector<16xf32> to vector<16x1xf32>
    %cst_47 = arith.constant 1.562500e-02 : f32
    %129 = vector.broadcast %cst_47 : f32 to vector<16x1xf32>
    %130 = arith.mulf %125, %129 : vector<16x1xf32>
    %cst_48 = arith.constant 1.562500e-02 : f32
    %131 = vector.broadcast %cst_48 : f32 to vector<16x1xf32>
    %132 = arith.mulf %128, %131 : vector<16x1xf32>
    %133 = arith.mulf %130, %130 : vector<16x1xf32>
    %134 = arith.subf %132, %133 : vector<16x1xf32>
    %135 = vector.broadcast %130 : vector<16x1xf32> to vector<16x64xf32>
    %136 = arith.subf %122, %135 : vector<16x64xf32>
    %cst_49 = arith.constant 9.99999974E-6 : f32
    %137 = vector.broadcast %cst_49 : f32 to vector<16x1xf32>
    %138 = arith.addf %134, %137 : vector<16x1xf32>
    %139 = math.rsqrt %138 : vector<16x1xf32>
    %140 = vector.broadcast %139 : vector<16x1xf32> to vector<16x64xf32>
    %141 = arith.mulf %136, %140 : vector<16x64xf32>
    %142 = vector.broadcast %123 : vector<1x64xf32> to vector<16x64xf32>
    %143 = arith.mulf %141, %142 : vector<16x64xf32>
    %c27 = arith.constant 27 : index
    %c0_50 = arith.constant 0 : index
    %144 = vector.load %arg2[%c27, %c0_50] : memref<1224x128xf32, #tpu.memory_space<vmem>>, vector<1x64xf32>
    %145 = vector.broadcast %144 : vector<1x64xf32> to vector<16x64xf32>
    %146 = arith.mulf %88, %145 : vector<16x64xf32>
    %147 = arith.addf %146, %143 : vector<16x64xf32>
    %c200 = arith.constant 200 : index
    %c0_51 = arith.constant 0 : index
    %148 = vector.load %arg2[%c200, %c0_51] : memref<1224x128xf32, #tpu.memory_space<vmem>>, vector<64x128xf32>
    %cst_52 = arith.constant dense<0.000000e+00> : vector<16x128xf32>
    %149 = tpu.matmul %147, %148, %cst_52 {dimension_numbers = #tpu.dot_dimension_numbers<[1], [0], [0], [1], [0, 0, 1, 1], [], []>} : vector<16x64xf32>, vector<64x128xf32>, vector<16x128xf32> -> vector<16x128xf32>
    %c4 = arith.constant 4 : index
    %c0_53 = arith.constant 0 : index
    %150 = vector.load %arg2[%c4, %c0_53] : memref<1224x128xf32, #tpu.memory_space<vmem>>, vector<1x128xf32>
    %151 = vector.broadcast %150 : vector<1x128xf32> to vector<16x128xf32>
    %152 = arith.addf %149, %151 : vector<16x128xf32>
    %cst_54 = arith.constant 0.000000e+00 : f32
    %153 = vector.broadcast %cst_54 : f32 to vector<16x128xf32>
    %154 = arith.maximumf %152, %153 : vector<16x128xf32>
    %155 = arith.mulf %154, %154 : vector<16x128xf32>
    %c10 = arith.constant 10 : index
    %c0_55 = arith.constant 0 : index
    %156 = vector.load %arg2[%c10, %c0_55] : memref<1224x128xf32, #tpu.memory_space<vmem>>, vector<1x128xf32>
    %cst_56 = arith.constant dense<0.000000e+00> : vector<16xf32>
    %157 = vector.multi_reduction <add>, %155, %cst_56 [1] : vector<16x128xf32> to vector<16xf32>
    %158 = vector.shape_cast %157 : vector<16xf32> to vector<16x1xf32>
    %159 = arith.mulf %155, %155 : vector<16x128xf32>
    %cst_57 = arith.constant dense<0.000000e+00> : vector<16xf32>
    %160 = vector.multi_reduction <add>, %159, %cst_57 [1] : vector<16x128xf32> to vector<16xf32>
    %161 = vector.shape_cast %160 : vector<16xf32> to vector<16x1xf32>
    %cst_58 = arith.constant 7.812500e-03 : f32
    %162 = vector.broadcast %cst_58 : f32 to vector<16x1xf32>
    %163 = arith.mulf %158, %162 : vector<16x1xf32>
    %cst_59 = arith.constant 7.812500e-03 : f32
    %164 = vector.broadcast %cst_59 : f32 to vector<16x1xf32>
    %165 = arith.mulf %161, %164 : vector<16x1xf32>
    %166 = arith.mulf %163, %163 : vector<16x1xf32>
    %167 = arith.subf %165, %166 : vector<16x1xf32>
    %168 = vector.broadcast %163 : vector<16x1xf32> to vector<16x128xf32>
    %169 = arith.subf %155, %168 : vector<16x128xf32>
    %cst_60 = arith.constant 9.99999974E-6 : f32
    %170 = vector.broadcast %cst_60 : f32 to vector<16x1xf32>
    %171 = arith.addf %167, %170 : vector<16x1xf32>
    %172 = math.rsqrt %171 : vector<16x1xf32>
    %173 = vector.broadcast %172 : vector<16x1xf32> to vector<16x128xf32>
    %174 = arith.mulf %169, %173 : vector<16x128xf32>
    %175 = vector.broadcast %156 : vector<1x128xf32> to vector<16x128xf32>
    %176 = arith.mulf %174, %175 : vector<16x128xf32>
    %c712 = arith.constant 712 : index
    %c0_61 = arith.constant 0 : index
    %177 = vector.load %arg2[%c712, %c0_61] : memref<1224x128xf32, #tpu.memory_space<vmem>>, vector<128x64xf32>
    %cst_62 = arith.constant dense<0.000000e+00> : vector<16x64xf32>
    %178 = tpu.matmul %176, %177, %cst_62 {dimension_numbers = #tpu.dot_dimension_numbers<[1], [0], [0], [1], [0, 0, 1, 1], [], []>} : vector<16x128xf32>, vector<128x64xf32>, vector<16x64xf32> -> vector<16x64xf32>
    %c16 = arith.constant 16 : index
    %c0_63 = arith.constant 0 : index
    %179 = vector.load %arg2[%c16, %c0_63] : memref<1224x128xf32, #tpu.memory_space<vmem>>, vector<1x64xf32>
    %180 = vector.broadcast %179 : vector<1x64xf32> to vector<16x64xf32>
    %181 = arith.addf %178, %180 : vector<16x64xf32>
    %c22 = arith.constant 22 : index
    %c0_64 = arith.constant 0 : index
    %182 = vector.load %arg2[%c22, %c0_64] : memref<1224x128xf32, #tpu.memory_space<vmem>>, vector<1x64xf32>
    %cst_65 = arith.constant dense<0.000000e+00> : vector<16xf32>
    %183 = vector.multi_reduction <add>, %181, %cst_65 [1] : vector<16x64xf32> to vector<16xf32>
    %184 = vector.shape_cast %183 : vector<16xf32> to vector<16x1xf32>
    %185 = arith.mulf %181, %181 : vector<16x64xf32>
    %cst_66 = arith.constant dense<0.000000e+00> : vector<16xf32>
    %186 = vector.multi_reduction <add>, %185, %cst_66 [1] : vector<16x64xf32> to vector<16xf32>
    %187 = vector.shape_cast %186 : vector<16xf32> to vector<16x1xf32>
    %cst_67 = arith.constant 1.562500e-02 : f32
    %188 = vector.broadcast %cst_67 : f32 to vector<16x1xf32>
    %189 = arith.mulf %184, %188 : vector<16x1xf32>
    %cst_68 = arith.constant 1.562500e-02 : f32
    %190 = vector.broadcast %cst_68 : f32 to vector<16x1xf32>
    %191 = arith.mulf %187, %190 : vector<16x1xf32>
    %192 = arith.mulf %189, %189 : vector<16x1xf32>
    %193 = arith.subf %191, %192 : vector<16x1xf32>
    %194 = vector.broadcast %189 : vector<16x1xf32> to vector<16x64xf32>
    %195 = arith.subf %181, %194 : vector<16x64xf32>
    %cst_69 = arith.constant 9.99999974E-6 : f32
    %196 = vector.broadcast %cst_69 : f32 to vector<16x1xf32>
    %197 = arith.addf %193, %196 : vector<16x1xf32>
    %198 = math.rsqrt %197 : vector<16x1xf32>
    %199 = vector.broadcast %198 : vector<16x1xf32> to vector<16x64xf32>
    %200 = arith.mulf %195, %199 : vector<16x64xf32>
    %201 = vector.broadcast %182 : vector<1x64xf32> to vector<16x64xf32>
    %202 = arith.mulf %200, %201 : vector<16x64xf32>
    %c28 = arith.constant 28 : index
    %c0_70 = arith.constant 0 : index
    %203 = vector.load %arg2[%c28, %c0_70] : memref<1224x128xf32, #tpu.memory_space<vmem>>, vector<1x64xf32>
    %204 = vector.broadcast %203 : vector<1x64xf32> to vector<16x64xf32>
    %205 = arith.mulf %147, %204 : vector<16x64xf32>
    %206 = arith.addf %205, %202 : vector<16x64xf32>
    %c264 = arith.constant 264 : index
    %c0_71 = arith.constant 0 : index
    %207 = vector.load %arg2[%c264, %c0_71] : memref<1224x128xf32, #tpu.memory_space<vmem>>, vector<64x128xf32>
    %cst_72 = arith.constant dense<0.000000e+00> : vector<16x128xf32>
    %208 = tpu.matmul %206, %207, %cst_72 {dimension_numbers = #tpu.dot_dimension_numbers<[1], [0], [0], [1], [0, 0, 1, 1], [], []>} : vector<16x64xf32>, vector<64x128xf32>, vector<16x128xf32> -> vector<16x128xf32>
    %c5 = arith.constant 5 : index
    %c0_73 = arith.constant 0 : index
    %209 = vector.load %arg2[%c5, %c0_73] : memref<1224x128xf32, #tpu.memory_space<vmem>>, vector<1x128xf32>
    %210 = vector.broadcast %209 : vector<1x128xf32> to vector<16x128xf32>
    %211 = arith.addf %208, %210 : vector<16x128xf32>
    %cst_74 = arith.constant 0.000000e+00 : f32
    %212 = vector.broadcast %cst_74 : f32 to vector<16x128xf32>
    %213 = arith.maximumf %211, %212 : vector<16x128xf32>
    %214 = arith.mulf %213, %213 : vector<16x128xf32>
    %c11 = arith.constant 11 : index
    %c0_75 = arith.constant 0 : index
    %215 = vector.load %arg2[%c11, %c0_75] : memref<1224x128xf32, #tpu.memory_space<vmem>>, vector<1x128xf32>
    %cst_76 = arith.constant dense<0.000000e+00> : vector<16xf32>
    %216 = vector.multi_reduction <add>, %214, %cst_76 [1] : vector<16x128xf32> to vector<16xf32>
    %217 = vector.shape_cast %216 : vector<16xf32> to vector<16x1xf32>
    %218 = arith.mulf %214, %214 : vector<16x128xf32>
    %cst_77 = arith.constant dense<0.000000e+00> : vector<16xf32>
    %219 = vector.multi_reduction <add>, %218, %cst_77 [1] : vector<16x128xf32> to vector<16xf32>
    %220 = vector.shape_cast %219 : vector<16xf32> to vector<16x1xf32>
    %cst_78 = arith.constant 7.812500e-03 : f32
    %221 = vector.broadcast %cst_78 : f32 to vector<16x1xf32>
    %222 = arith.mulf %217, %221 : vector<16x1xf32>
    %cst_79 = arith.constant 7.812500e-03 : f32
    %223 = vector.broadcast %cst_79 : f32 to vector<16x1xf32>
    %224 = arith.mulf %220, %223 : vector<16x1xf32>
    %225 = arith.mulf %222, %222 : vector<16x1xf32>
    %226 = arith.subf %224, %225 : vector<16x1xf32>
    %227 = vector.broadcast %222 : vector<16x1xf32> to vector<16x128xf32>
    %228 = arith.subf %214, %227 : vector<16x128xf32>
    %cst_80 = arith.constant 9.99999974E-6 : f32
    %229 = vector.broadcast %cst_80 : f32 to vector<16x1xf32>
    %230 = arith.addf %226, %229 : vector<16x1xf32>
    %231 = math.rsqrt %230 : vector<16x1xf32>
    %232 = vector.broadcast %231 : vector<16x1xf32> to vector<16x128xf32>
    %233 = arith.mulf %228, %232 : vector<16x128xf32>
    %234 = vector.broadcast %215 : vector<1x128xf32> to vector<16x128xf32>
    %235 = arith.mulf %233, %234 : vector<16x128xf32>
    %c840 = arith.constant 840 : index
    %c0_81 = arith.constant 0 : index
    %236 = vector.load %arg2[%c840, %c0_81] : memref<1224x128xf32, #tpu.memory_space<vmem>>, vector<128x64xf32>
    %cst_82 = arith.constant dense<0.000000e+00> : vector<16x64xf32>
    %237 = tpu.matmul %235, %236, %cst_82 {dimension_numbers = #tpu.dot_dimension_numbers<[1], [0], [0], [1], [0, 0, 1, 1], [], []>} : vector<16x128xf32>, vector<128x64xf32>, vector<16x64xf32> -> vector<16x64xf32>
    %c17 = arith.constant 17 : index
    %c0_83 = arith.constant 0 : index
    %238 = vector.load %arg2[%c17, %c0_83] : memref<1224x128xf32, #tpu.memory_space<vmem>>, vector<1x64xf32>
    %239 = vector.broadcast %238 : vector<1x64xf32> to vector<16x64xf32>
    %240 = arith.addf %237, %239 : vector<16x64xf32>
    %c23 = arith.constant 23 : index
    %c0_84 = arith.constant 0 : index
    %241 = vector.load %arg2[%c23, %c0_84] : memref<1224x128xf32, #tpu.memory_space<vmem>>, vector<1x64xf32>
    %cst_85 = arith.constant dense<0.000000e+00> : vector<16xf32>
    %242 = vector.multi_reduction <add>, %240, %cst_85 [1] : vector<16x64xf32> to vector<16xf32>
    %243 = vector.shape_cast %242 : vector<16xf32> to vector<16x1xf32>
    %244 = arith.mulf %240, %240 : vector<16x64xf32>
    %cst_86 = arith.constant dense<0.000000e+00> : vector<16xf32>
    %245 = vector.multi_reduction <add>, %244, %cst_86 [1] : vector<16x64xf32> to vector<16xf32>
    %246 = vector.shape_cast %245 : vector<16xf32> to vector<16x1xf32>
    %cst_87 = arith.constant 1.562500e-02 : f32
    %247 = vector.broadcast %cst_87 : f32 to vector<16x1xf32>
    %248 = arith.mulf %243, %247 : vector<16x1xf32>
    %cst_88 = arith.constant 1.562500e-02 : f32
    %249 = vector.broadcast %cst_88 : f32 to vector<16x1xf32>
    %250 = arith.mulf %246, %249 : vector<16x1xf32>
    %251 = arith.mulf %248, %248 : vector<16x1xf32>
    %252 = arith.subf %250, %251 : vector<16x1xf32>
    %253 = vector.broadcast %248 : vector<16x1xf32> to vector<16x64xf32>
    %254 = arith.subf %240, %253 : vector<16x64xf32>
    %cst_89 = arith.constant 9.99999974E-6 : f32
    %255 = vector.broadcast %cst_89 : f32 to vector<16x1xf32>
    %256 = arith.addf %252, %255 : vector<16x1xf32>
    %257 = math.rsqrt %256 : vector<16x1xf32>
    %258 = vector.broadcast %257 : vector<16x1xf32> to vector<16x64xf32>
    %259 = arith.mulf %254, %258 : vector<16x64xf32>
    %260 = vector.broadcast %241 : vector<1x64xf32> to vector<16x64xf32>
    %261 = arith.mulf %259, %260 : vector<16x64xf32>
    %c29 = arith.constant 29 : index
    %c0_90 = arith.constant 0 : index
    %262 = vector.load %arg2[%c29, %c0_90] : memref<1224x128xf32, #tpu.memory_space<vmem>>, vector<1x64xf32>
    %263 = vector.broadcast %262 : vector<1x64xf32> to vector<16x64xf32>
    %264 = arith.mulf %206, %263 : vector<16x64xf32>
    %265 = arith.addf %264, %261 : vector<16x64xf32>
    %c328 = arith.constant 328 : index
    %c0_91 = arith.constant 0 : index
    %266 = vector.load %arg2[%c328, %c0_91] : memref<1224x128xf32, #tpu.memory_space<vmem>>, vector<64x128xf32>
    %cst_92 = arith.constant dense<0.000000e+00> : vector<16x128xf32>
    %267 = tpu.matmul %265, %266, %cst_92 {dimension_numbers = #tpu.dot_dimension_numbers<[1], [0], [0], [1], [0, 0, 1, 1], [], []>} : vector<16x64xf32>, vector<64x128xf32>, vector<16x128xf32> -> vector<16x128xf32>
    %c6 = arith.constant 6 : index
    %c0_93 = arith.constant 0 : index
    %268 = vector.load %arg2[%c6, %c0_93] : memref<1224x128xf32, #tpu.memory_space<vmem>>, vector<1x128xf32>
    %269 = vector.broadcast %268 : vector<1x128xf32> to vector<16x128xf32>
    %270 = arith.addf %267, %269 : vector<16x128xf32>
    %cst_94 = arith.constant 0.000000e+00 : f32
    %271 = vector.broadcast %cst_94 : f32 to vector<16x128xf32>
    %272 = arith.maximumf %270, %271 : vector<16x128xf32>
    %273 = arith.mulf %272, %272 : vector<16x128xf32>
    %c12 = arith.constant 12 : index
    %c0_95 = arith.constant 0 : index
    %274 = vector.load %arg2[%c12, %c0_95] : memref<1224x128xf32, #tpu.memory_space<vmem>>, vector<1x128xf32>
    %cst_96 = arith.constant dense<0.000000e+00> : vector<16xf32>
    %275 = vector.multi_reduction <add>, %273, %cst_96 [1] : vector<16x128xf32> to vector<16xf32>
    %276 = vector.shape_cast %275 : vector<16xf32> to vector<16x1xf32>
    %277 = arith.mulf %273, %273 : vector<16x128xf32>
    %cst_97 = arith.constant dense<0.000000e+00> : vector<16xf32>
    %278 = vector.multi_reduction <add>, %277, %cst_97 [1] : vector<16x128xf32> to vector<16xf32>
    %279 = vector.shape_cast %278 : vector<16xf32> to vector<16x1xf32>
    %cst_98 = arith.constant 7.812500e-03 : f32
    %280 = vector.broadcast %cst_98 : f32 to vector<16x1xf32>
    %281 = arith.mulf %276, %280 : vector<16x1xf32>
    %cst_99 = arith.constant 7.812500e-03 : f32
    %282 = vector.broadcast %cst_99 : f32 to vector<16x1xf32>
    %283 = arith.mulf %279, %282 : vector<16x1xf32>
    %284 = arith.mulf %281, %281 : vector<16x1xf32>
    %285 = arith.subf %283, %284 : vector<16x1xf32>
    %286 = vector.broadcast %281 : vector<16x1xf32> to vector<16x128xf32>
    %287 = arith.subf %273, %286 : vector<16x128xf32>
    %cst_100 = arith.constant 9.99999974E-6 : f32
    %288 = vector.broadcast %cst_100 : f32 to vector<16x1xf32>
    %289 = arith.addf %285, %288 : vector<16x1xf32>
    %290 = math.rsqrt %289 : vector<16x1xf32>
    %291 = vector.broadcast %290 : vector<16x1xf32> to vector<16x128xf32>
    %292 = arith.mulf %287, %291 : vector<16x128xf32>
    %293 = vector.broadcast %274 : vector<1x128xf32> to vector<16x128xf32>
    %294 = arith.mulf %292, %293 : vector<16x128xf32>
    %c968 = arith.constant 968 : index
    %c0_101 = arith.constant 0 : index
    %295 = vector.load %arg2[%c968, %c0_101] : memref<1224x128xf32, #tpu.memory_space<vmem>>, vector<128x64xf32>
    %cst_102 = arith.constant dense<0.000000e+00> : vector<16x64xf32>
    %296 = tpu.matmul %294, %295, %cst_102 {dimension_numbers = #tpu.dot_dimension_numbers<[1], [0], [0], [1], [0, 0, 1, 1], [], []>} : vector<16x128xf32>, vector<128x64xf32>, vector<16x64xf32> -> vector<16x64xf32>
    %c18 = arith.constant 18 : index
    %c0_103 = arith.constant 0 : index
    %297 = vector.load %arg2[%c18, %c0_103] : memref<1224x128xf32, #tpu.memory_space<vmem>>, vector<1x64xf32>
    %298 = vector.broadcast %297 : vector<1x64xf32> to vector<16x64xf32>
    %299 = arith.addf %296, %298 : vector<16x64xf32>
    %c24 = arith.constant 24 : index
    %c0_104 = arith.constant 0 : index
    %300 = vector.load %arg2[%c24, %c0_104] : memref<1224x128xf32, #tpu.memory_space<vmem>>, vector<1x64xf32>
    %cst_105 = arith.constant dense<0.000000e+00> : vector<16xf32>
    %301 = vector.multi_reduction <add>, %299, %cst_105 [1] : vector<16x64xf32> to vector<16xf32>
    %302 = vector.shape_cast %301 : vector<16xf32> to vector<16x1xf32>
    %303 = arith.mulf %299, %299 : vector<16x64xf32>
    %cst_106 = arith.constant dense<0.000000e+00> : vector<16xf32>
    %304 = vector.multi_reduction <add>, %303, %cst_106 [1] : vector<16x64xf32> to vector<16xf32>
    %305 = vector.shape_cast %304 : vector<16xf32> to vector<16x1xf32>
    %cst_107 = arith.constant 1.562500e-02 : f32
    %306 = vector.broadcast %cst_107 : f32 to vector<16x1xf32>
    %307 = arith.mulf %302, %306 : vector<16x1xf32>
    %cst_108 = arith.constant 1.562500e-02 : f32
    %308 = vector.broadcast %cst_108 : f32 to vector<16x1xf32>
    %309 = arith.mulf %305, %308 : vector<16x1xf32>
    %310 = arith.mulf %307, %307 : vector<16x1xf32>
    %311 = arith.subf %309, %310 : vector<16x1xf32>
    %312 = vector.broadcast %307 : vector<16x1xf32> to vector<16x64xf32>
    %313 = arith.subf %299, %312 : vector<16x64xf32>
    %cst_109 = arith.constant 9.99999974E-6 : f32
    %314 = vector.broadcast %cst_109 : f32 to vector<16x1xf32>
    %315 = arith.addf %311, %314 : vector<16x1xf32>
    %316 = math.rsqrt %315 : vector<16x1xf32>
    %317 = vector.broadcast %316 : vector<16x1xf32> to vector<16x64xf32>
    %318 = arith.mulf %313, %317 : vector<16x64xf32>
    %319 = vector.broadcast %300 : vector<1x64xf32> to vector<16x64xf32>
    %320 = arith.mulf %318, %319 : vector<16x64xf32>
    %c30 = arith.constant 30 : index
    %c0_110 = arith.constant 0 : index
    %321 = vector.load %arg2[%c30, %c0_110] : memref<1224x128xf32, #tpu.memory_space<vmem>>, vector<1x64xf32>
    %322 = vector.broadcast %321 : vector<1x64xf32> to vector<16x64xf32>
    %323 = arith.mulf %265, %322 : vector<16x64xf32>
    %324 = arith.addf %323, %320 : vector<16x64xf32>
    %c392 = arith.constant 392 : index
    %c0_111 = arith.constant 0 : index
    %325 = vector.load %arg2[%c392, %c0_111] : memref<1224x128xf32, #tpu.memory_space<vmem>>, vector<64x128xf32>
    %cst_112 = arith.constant dense<0.000000e+00> : vector<16x128xf32>
    %326 = tpu.matmul %324, %325, %cst_112 {dimension_numbers = #tpu.dot_dimension_numbers<[1], [0], [0], [1], [0, 0, 1, 1], [], []>} : vector<16x64xf32>, vector<64x128xf32>, vector<16x128xf32> -> vector<16x128xf32>
    %c7 = arith.constant 7 : index
    %c0_113 = arith.constant 0 : index
    %327 = vector.load %arg2[%c7, %c0_113] : memref<1224x128xf32, #tpu.memory_space<vmem>>, vector<1x128xf32>
    %328 = vector.broadcast %327 : vector<1x128xf32> to vector<16x128xf32>
    %329 = arith.addf %326, %328 : vector<16x128xf32>
    %cst_114 = arith.constant 0.000000e+00 : f32
    %330 = vector.broadcast %cst_114 : f32 to vector<16x128xf32>
    %331 = arith.maximumf %329, %330 : vector<16x128xf32>
    %332 = arith.mulf %331, %331 : vector<16x128xf32>
    %c13 = arith.constant 13 : index
    %c0_115 = arith.constant 0 : index
    %333 = vector.load %arg2[%c13, %c0_115] : memref<1224x128xf32, #tpu.memory_space<vmem>>, vector<1x128xf32>
    %cst_116 = arith.constant dense<0.000000e+00> : vector<16xf32>
    %334 = vector.multi_reduction <add>, %332, %cst_116 [1] : vector<16x128xf32> to vector<16xf32>
    %335 = vector.shape_cast %334 : vector<16xf32> to vector<16x1xf32>
    %336 = arith.mulf %332, %332 : vector<16x128xf32>
    %cst_117 = arith.constant dense<0.000000e+00> : vector<16xf32>
    %337 = vector.multi_reduction <add>, %336, %cst_117 [1] : vector<16x128xf32> to vector<16xf32>
    %338 = vector.shape_cast %337 : vector<16xf32> to vector<16x1xf32>
    %cst_118 = arith.constant 7.812500e-03 : f32
    %339 = vector.broadcast %cst_118 : f32 to vector<16x1xf32>
    %340 = arith.mulf %335, %339 : vector<16x1xf32>
    %cst_119 = arith.constant 7.812500e-03 : f32
    %341 = vector.broadcast %cst_119 : f32 to vector<16x1xf32>
    %342 = arith.mulf %338, %341 : vector<16x1xf32>
    %343 = arith.mulf %340, %340 : vector<16x1xf32>
    %344 = arith.subf %342, %343 : vector<16x1xf32>
    %345 = vector.broadcast %340 : vector<16x1xf32> to vector<16x128xf32>
    %346 = arith.subf %332, %345 : vector<16x128xf32>
    %cst_120 = arith.constant 9.99999974E-6 : f32
    %347 = vector.broadcast %cst_120 : f32 to vector<16x1xf32>
    %348 = arith.addf %344, %347 : vector<16x1xf32>
    %349 = math.rsqrt %348 : vector<16x1xf32>
    %350 = vector.broadcast %349 : vector<16x1xf32> to vector<16x128xf32>
    %351 = arith.mulf %346, %350 : vector<16x128xf32>
    %352 = vector.broadcast %333 : vector<1x128xf32> to vector<16x128xf32>
    %353 = arith.mulf %351, %352 : vector<16x128xf32>
    %c1096 = arith.constant 1096 : index
    %c0_121 = arith.constant 0 : index
    %354 = vector.load %arg2[%c1096, %c0_121] : memref<1224x128xf32, #tpu.memory_space<vmem>>, vector<128x64xf32>
    %cst_122 = arith.constant dense<0.000000e+00> : vector<16x64xf32>
    %355 = tpu.matmul %353, %354, %cst_122 {dimension_numbers = #tpu.dot_dimension_numbers<[1], [0], [0], [1], [0, 0, 1, 1], [], []>} : vector<16x128xf32>, vector<128x64xf32>, vector<16x64xf32> -> vector<16x64xf32>
    %c19 = arith.constant 19 : index
    %c0_123 = arith.constant 0 : index
    %356 = vector.load %arg2[%c19, %c0_123] : memref<1224x128xf32, #tpu.memory_space<vmem>>, vector<1x64xf32>
    %357 = vector.broadcast %356 : vector<1x64xf32> to vector<16x64xf32>
    %358 = arith.addf %355, %357 : vector<16x64xf32>
    %c25 = arith.constant 25 : index
    %c0_124 = arith.constant 0 : index
    %359 = vector.load %arg2[%c25, %c0_124] : memref<1224x128xf32, #tpu.memory_space<vmem>>, vector<1x64xf32>
    %cst_125 = arith.constant dense<0.000000e+00> : vector<16xf32>
    %360 = vector.multi_reduction <add>, %358, %cst_125 [1] : vector<16x64xf32> to vector<16xf32>
    %361 = vector.shape_cast %360 : vector<16xf32> to vector<16x1xf32>
    %362 = arith.mulf %358, %358 : vector<16x64xf32>
    %cst_126 = arith.constant dense<0.000000e+00> : vector<16xf32>
    %363 = vector.multi_reduction <add>, %362, %cst_126 [1] : vector<16x64xf32> to vector<16xf32>
    %364 = vector.shape_cast %363 : vector<16xf32> to vector<16x1xf32>
    %cst_127 = arith.constant 1.562500e-02 : f32
    %365 = vector.broadcast %cst_127 : f32 to vector<16x1xf32>
    %366 = arith.mulf %361, %365 : vector<16x1xf32>
    %cst_128 = arith.constant 1.562500e-02 : f32
    %367 = vector.broadcast %cst_128 : f32 to vector<16x1xf32>
    %368 = arith.mulf %364, %367 : vector<16x1xf32>
    %369 = arith.mulf %366, %366 : vector<16x1xf32>
    %370 = arith.subf %368, %369 : vector<16x1xf32>
    %371 = vector.broadcast %366 : vector<16x1xf32> to vector<16x64xf32>
    %372 = arith.subf %358, %371 : vector<16x64xf32>
    %cst_129 = arith.constant 9.99999974E-6 : f32
    %373 = vector.broadcast %cst_129 : f32 to vector<16x1xf32>
    %374 = arith.addf %370, %373 : vector<16x1xf32>
    %375 = math.rsqrt %374 : vector<16x1xf32>
    %376 = vector.broadcast %375 : vector<16x1xf32> to vector<16x64xf32>
    %377 = arith.mulf %372, %376 : vector<16x64xf32>
    %378 = vector.broadcast %359 : vector<1x64xf32> to vector<16x64xf32>
    %379 = arith.mulf %377, %378 : vector<16x64xf32>
    %c31 = arith.constant 31 : index
    %c0_130 = arith.constant 0 : index
    %380 = vector.load %arg2[%c31, %c0_130] : memref<1224x128xf32, #tpu.memory_space<vmem>>, vector<1x64xf32>
    %381 = vector.broadcast %380 : vector<1x64xf32> to vector<16x64xf32>
    %382 = arith.mulf %324, %381 : vector<16x64xf32>
    %383 = arith.addf %382, %379 : vector<16x64xf32>
    %c32 = arith.constant 32 : index
    %c0_131 = arith.constant 0 : index
    %384 = vector.load %arg2[%c32, %c0_131] : memref<1224x128xf32, #tpu.memory_space<vmem>>, vector<1x64xf32>
    %c33 = arith.constant 33 : index
    %c0_132 = arith.constant 0 : index
    %385 = vector.load %arg2[%c33, %c0_132] : memref<1224x128xf32, #tpu.memory_space<vmem>>, vector<1x1xf32>
    %386 = vector.broadcast %384 : vector<1x64xf32> to vector<16x64xf32>
    %387 = arith.mulf %383, %386 : vector<16x64xf32>
    %cst_133 = arith.constant dense<0.000000e+00> : vector<16xf32>
    %388 = vector.multi_reduction <add>, %387, %cst_133 [1] : vector<16x64xf32> to vector<16xf32>
    %389 = vector.shape_cast %388 : vector<16xf32> to vector<16x1xf32>
    %390 = vector.broadcast %385 : vector<1x1xf32> to vector<16x1xf32>
    %391 = arith.addf %389, %390 : vector<16x1xf32>
    %c0_134 = arith.constant 0 : index
    %c0_135 = arith.constant 0 : index
    %392 = vector.load %arg3[%c0_134, %c0_135] : memref<16x1xf32, #tpu.memory_space<vmem>>, vector<16x1xf32>
    tpu.vector_store %arg3[%c0_134, %c0_135], %391 {strides = array<i32>} : memref<16x1xf32, #tpu.memory_space<vmem>>, vector<16x1xf32>,
    return
  }
  func.func @transform_0(%arg0: i32) -> (i32, i32) {
    %c0_i32 = arith.constant 0 : i32
    %c0_i32_0 = arith.constant 0 : i32
    return %arg0, %c0_i32 : i32, i32
  }
  func.func @transform_1(%arg0: i32) -> (i32, i32) {
    %c0_i32 = arith.constant 0 : i32
    %c0_i32_0 = arith.constant 0 : i32
    %c0_i32_1 = arith.constant 0 : i32
    return %c0_i32, %c0_i32_0 : i32, i32
  }
  func.func @transform_2(%arg0: i32) -> (i32, i32) {
    %c0_i32 = arith.constant 0 : i32
    %c0_i32_0 = arith.constant 0 : i32
    return %arg0, %c0_i32 : i32, i32
  }
}

</mosaic_0001>

<llo_original>
// kernel: tpu_custom_call.1
$region0: #{tpu_custom_call.1}
  #allocation0 [shape = 'u32[]', space=smem, size = 0x4, offset = 0x4, fixed_abs, tag = 'smem constant byte address 0x4 - core index']
  #allocation1 [shape = 'u32[144,128]{1,0:T(1,128)}', space=vmem, size = 0x12000, scoped, tag = 'internal scratch']
  %s0 = inlined_call_operand.hbm [shape: f32[16,32], index: 0, kind: input, shape index: {}]
  %s1 = inlined_call_operand.hbm [shape: f32[1224,128], index: 1, kind: input, shape index: {}]
  %s2 = inlined_call_operand.vmem [shape: f32[16,1], index: 2, kind: output, shape index: {}]
  %s3 = sld [smem:[#allocation0]]
  $region26: #{tpu_custom_call.1} parent=0
    _
  %s5 = ssub.s32 1, %s3
  %s6 = scalar_select 0, %s5, %s3
  $region1: #{tpu_custom_call.1} parent=0
    #allocation2 [shape = 'u8[8192]{0}', space=vmem, size = 0x2000, scoped, tag = 'input window, operand 0, single buffered']
    #allocation3 [shape = 's32[1]{0}', space=sflag, size = 0x4, scoped, tag = 'scoped memory for tpu_custom_call.1']
    #allocation4 [shape = 'u8[626688]{0}', space=vmem, size = 0x99000, scoped, tag = 'input window, operand 1, single buffered']
    #allocation5 [shape = 's32[1]{0}', space=sflag, size = 0x4, scoped, tag = 'scoped memory for tpu_custom_call.1']
    %7 = vsyncpa [#allocation3], 0
    %8 = vsyncpa [#allocation5], 0
    // Predicated region
    $region2: #{tpu_custom_call.1} parent=1 // pred_check
      _
    $region3: #{tpu_custom_call.1} parent=1 // pred_check_branch
      %10 = sbr.rel (0) target = $region5
    $region4: #{tpu_custom_call.1} parent=1 // pred_region
      %s12 = ssub.s32 256, 256
      %13 = vsyncadd [#allocation3], %s12
      %s14 = sshll.u32 [#allocation2], 4
      %s15 = int_to_ptr.vmem [resolvable:$true] %s14
      %20 = dma.hbm_to_vmem [thread:$0]  %s0, 256, %s15, [#allocation3], 128, 128, 8
    $region5: #{tpu_custom_call.1} parent=1 // pred_fallthru
      _
    // Predicated region
    $region6: #{tpu_custom_call.1} parent=1 // pred_check
      _
    $region7: #{tpu_custom_call.1} parent=1 // pred_check_branch
      %22 = sbr.rel (0) target = $region9
    $region8: #{tpu_custom_call.1} parent=1 // pred_region
      %s24 = ssub.s32 19584, 19584
      %25 = vsyncadd [#allocation5], %s24
      %s26 = sshll.u32 [#allocation4], 4
      %s27 = int_to_ptr.vmem [resolvable:$true] %s26
      %32 = dma.hbm_to_vmem [thread:$0]  %s1, 19584, %s27, [#allocation5], 128, 128, 8
    $region9: #{tpu_custom_call.1} parent=1 // pred_fallthru
      _
    // Predicated region
    $region10: #{tpu_custom_call.1} parent=1 // pred_check
      _
    $region11: #{tpu_custom_call.1} parent=1 // pred_check_branch
      %34 = sbr.rel (0) target = $region13
    $region12: #{tpu_custom_call.1} parent=1 // pred_region
      %35 = dma.done [#allocation3], 256
    $region13: #{tpu_custom_call.1} parent=1 // pred_fallthru
      _
    // Predicated region
    $region14: #{tpu_custom_call.1} parent=1 // pred_check
      _
    $region15: #{tpu_custom_call.1} parent=1 // pred_check_branch
      %37 = sbr.rel (0) target = $region17
    $region16: #{tpu_custom_call.1} parent=1 // pred_region
      %38 = dma.done [#allocation5], 19584
    $region17: #{tpu_custom_call.1} parent=1 // pred_fallthru
      _
    %v39 = vld [vmem:[#allocation2] sm:$0xff]
    %v40 = vld [vmem:[#allocation2 + $0x8] sm:$0xff]
    %v41 = vld [vmem:[#allocation4 + $0x28] sm:$0xff]
    %v42 = vld [vmem:[#allocation4 + $0x30] sm:$0xff]
    %v43 = vld [vmem:[#allocation4 + $0x38] sm:$0xff]
    %v44 = vld [vmem:[#allocation4 + $0x40] sm:$0xff]
    %v45 = vld [vmem:[#allocation4] sm:$0x1]
    %v46 = vlaneseq
    %v47 = vshrl.u32 %v46, 7
    %v48 = vsub.s32 0, %v47
    %v49 = vrot.slane %v45, %v48
    %vm50 = vcmask 261120
    %v52 = vsel %vm50, %v39, 0
    %v55 = vsel %vm50, %v40, 0
    %57 = vmatprep.subr.mxu0 0.0
    %58 = vmatpush1.msra.mxu0 %v41
    %59 = vmatprep.subr.mxu0 0.0
    %60 = vmatpush1.msra.mxu0 %v42
    %61 = vmatprep.subr.mxu0 0.0
    %62 = vmatpush1.msra.mxu0 %v43
    %63 = vmatprep.subr.mxu0 0.0
    %64 = vmatpush1.msra.mxu0 %v44
    %65 = vmatprep.subr.mxu0 0.0
    %66 = vmatpush1.msra.mxu0 0.0
    %67 = vmatprep.subr.mxu0 0.0
    %68 = vmatpush1.msra.mxu0 0.0
    %69 = vmatprep.subr.mxu0 0.0
    %70 = vmatpush1.msra.mxu0 0.0
    %71 = vmatprep.subr.mxu0 0.0
    %72 = vmatpush1.msra.mxu0 0.0
    %73 = vmatprep.subr.mxu0 0.0
    %74 = vmatpush1.msra.mxu0 0.0
    %75 = vmatprep.subr.mxu0 0.0
    %76 = vmatpush1.msra.mxu0 0.0
    %77 = vmatprep.subr.mxu0 0.0
    %78 = vmatpush1.msra.mxu0 0.0
    %79 = vmatprep.subr.mxu0 0.0
    %80 = vmatpush1.msra.mxu0 0.0
    %81 = vmatprep.subr.mxu0 0.0
    %82 = vmatpush1.msra.mxu0 0.0
    %83 = vmatprep.subr.mxu0 0.0
    %84 = vmatpush1.msra.mxu0 0.0
    %85 = vmatprep.subr.mxu0 0.0
    %86 = vmatpush1.msra.mxu0 0.0
    %87 = vmatprep.subr.mxu0 0.0
    %88 = vmatpush1.msra.mxu0 0.0
    %89 = vmatprep.subr.mxu0 0.0
    %90 = vmatpush1.msra.mxu0 0.0
    %91 = vmatprep.subr.mxu0 0.0
    %92 = vmatpush1.msra.mxu0 0.0
    %93 = vmatprep.subr.mxu0 0.0
    %94 = vmatpush1.msra.mxu0 0.0
    %95 = vmatprep.subr.mxu0 0.0
    %96 = vmatpush1.msra.mxu0 0.0
    %97 = vmatprep.subr.mxu0 0.0
    %98 = vmatpush1.msra.mxu0 0.0
    %99 = vmatprep.subr.mxu0 0.0
    %100 = vmatpush1.msra.mxu0 0.0
    %101 = vmatprep.subr.mxu0 0.0
    %102 = vmatpush1.msra.mxu0 0.0
    %103 = vmatprep.subr.mxu0 0.0
    %104 = vmatpush1.msra.mxu0 0.0
    %105 = vmatprep.subr.mxu0 0.0
    %106 = vmatpush1.msra.mxu0 0.0
    %107 = vmatprep.subr.mxu0 0.0
    %108 = vmatpush1.msra.mxu0 0.0
    %109 = vmatprep.subr.mxu0 0.0
    %110 = vmatpush1.msra.mxu0 0.0
    %111 = vmatprep.subr.mxu0 0.0
    %112 = vmatpush1.msra.mxu0 0.0
    %113 = vmatprep.subr.mxu0 0.0
    %114 = vmatpush1.msra.mxu0 0.0
    %115 = vmatprep.subr.mxu0 0.0
    %116 = vmatpush1.msra.mxu0 0.0
    %117 = vmatprep.subr.mxu0 0.0
    %118 = vmatpush1.msra.mxu0 0.0
    %119 = vmatprep.subr.mxu0 0.0
    %120 = vmatpush1.msra.mxu0 0.0
    %121 = vmatprep.mubr.f32.mxu0 0.0
    %122 = vmatmul.mubr.f32.gmra.mrb[0].mxu0 %v52
    %v123 = vpop.f32.mrb[0].mxu0
    %v124 = vadd.f32 %v49, %v123
    %v125 = vpop.f32.mrb[0].mxu0
    %126 = vmatprep.mubr.f32.mxu0 0.0
    %127 = vmatmul.mubr.f32.gmra.mrb[0].mxu0 %v55
    %v128 = vpop.f32.mrb[0].mxu0
    %v129 = vadd.f32 %v49, %v128
    %v130 = vpop.f32.mrb[0].mxu0
    %131 = vdwg.mxu0
    %v132 = vmax.f32 %v124, 0.0
    %v133 = vmax.f32 %v129, 0.0
    %v134 = vmul.f32 %v132, %v132
    %v135 = vmul.f32 %v133, %v133
    %v136 = vld [vmem:[#allocation4 + $0x1] sm:$0x1]
    %vm137 = vcmask 523264
    %v138 = vsel %vm137, %v134, 0.0
    %139 = vadd.xlane.f32.xlu0 %v138
    %v140 = vpop.xlane.xlu0 %139
    %v141 = vsel %vm137, %v135, 0.0
    %142 = vadd.xlane.f32.xlu0 %v141
    %v143 = vpop.xlane.xlu0 %142
    %v144 = vmul.f32 %v134, %v134
    %v145 = vmul.f32 %v135, %v135
    %v146 = vsel %vm137, %v144, 0.0
    %147 = vadd.xlane.f32.xlu0 %v146
    %v148 = vpop.xlane.xlu0 %147
    %v149 = vsel %vm137, %v145, 0.0
    %150 = vadd.xlane.f32.xlu0 %v149
    %v151 = vpop.xlane.xlu0 %150
    %v152 = vmul.f32 %v140, 0.015625
    %v153 = vmul.f32 %v143, 0.015625
    %v154 = vmul.f32 %v148, 0.015625
    %v155 = vmul.f32 %v151, 0.015625
    %v156 = vmul.f32 %v152, %v152
    %v157 = vmul.f32 %v153, %v153
    %v158 = vsub.f32 %v154, %v156
    %v159 = vsub.f32 %v155, %v157
    %v160 = vsub.f32 %v134, %v152
    %v161 = vsub.f32 %v135, %v153
    %v162 = vadd.f32 %v158, 1e-05
    %v163 = vadd.f32 %v159, 1e-05
    %v164 = vrsqrt.pop %v162
    %v165 = vrsqrt.pop %v163
    %v166 = vmul.f32 %v160, %v164
    %v167 = vmul.f32 %v161, %v165
    %v168 = vlaneseq
    %v169 = vshrl.u32 %v168, 7
    %v170 = vsub.s32 0, %v169
    %v171 = vrot.slane %v136, %v170
    %v172 = vmul.f32 %v166, %v171
    %v173 = vmul.f32 %v167, %v171
    %v174 = vld [vmem:[#allocation4 + $0x48] sm:$0xff]
    %v175 = vld [vmem:[#allocation4 + $0x50] sm:$0xff]
    %v176 = vld [vmem:[#allocation4 + $0x58] sm:$0xff]
    %v177 = vld [vmem:[#allocation4 + $0x60] sm:$0xff]
    %v178 = vld [vmem:[#allocation4 + $0x68] sm:$0xff]
    %v179 = vld [vmem:[#allocation4 + $0x70] sm:$0xff]
    %v180 = vld [vmem:[#allocation4 + $0x78] sm:$0xff]
    %v181 = vld [vmem:[#allocation4 + $0x80] sm:$0xff]
    %v182 = vld [vmem:[#allocation4 + $0x2] sm:$0x1]
    %v183 = vlaneseq
    %v184 = vshrl.u32 %v183, 7
    %v185 = vsub.s32 0, %v184
    %v186 = vrot.slane %v182, %v185
    %v188 = vsel %vm137, %v172, 0
    %v191 = vsel %vm137, %v173, 0
    %193 = vmatprep.subr.mxu0 0.0
    %194 = vmatpush1.msra.mxu0 %v174
    %195 = vmatprep.subr.mxu0 0.0
    %196 = vmatpush1.msra.mxu0 %v175
    %197 = vmatprep.subr.mxu0 0.0
    %198 = vmatpush1.msra.mxu0 %v176
    %199 = vmatprep.subr.mxu0 0.0
    %200 = vmatpush1.msra.mxu0 %v177
    %201 = vmatprep.subr.mxu0 0.0
    %202 = vmatpush1.msra.mxu0 %v178
    %203 = vmatprep.subr.mxu0 0.0
    %204 = vmatpush1.msra.mxu0 %v179
    %205 = vmatprep.subr.mxu0 0.0
    %206 = vmatpush1.msra.mxu0 %v180
    %207 = vmatprep.subr.mxu0 0.0
    %208 = vmatpush1.msra.mxu0 %v181
    %209 = vmatprep.subr.mxu0 0.0
    %210 = vmatpush1.msra.mxu0 0.0
    %211 = vmatprep.subr.mxu0 0.0
    %212 = vmatpush1.msra.mxu0 0.0
    %213 = vmatprep.subr.mxu0 0.0
    %214 = vmatpush1.msra.mxu0 0.0
    %215 = vmatprep.subr.mxu0 0.0
    %216 = vmatpush1.msra.mxu0 0.0
    %217 = vmatprep.subr.mxu0 0.0
    %218 = vmatpush1.msra.mxu0 0.0
    %219 = vmatprep.subr.mxu0 0.0
    %220 = vmatpush1.msra.mxu0 0.0
    %221 = vmatprep.subr.mxu0 0.0
    %222 = vmatpush1.msra.mxu0 0.0
    %223 = vmatprep.subr.mxu0 0.0
    %224 = vmatpush1.msra.mxu0 0.0
    %225 = vmatprep.subr.mxu0 0.0
    %226 = vmatpush1.msra.mxu0 0.0
    %227 = vmatprep.subr.mxu0 0.0
    %228 = vmatpush1.msra.mxu0 0.0
    %229 = vmatprep.subr.mxu0 0.0
    %230 = vmatpush1.msra.mxu0 0.0
    %231 = vmatprep.subr.mxu0 0.0
    %232 = vmatpush1.msra.mxu0 0.0
    %233 = vmatprep.subr.mxu0 0.0
    %234 = vmatpush1.msra.mxu0 0.0
    %235 = vmatprep.subr.mxu0 0.0
    %236 = vmatpush1.msra.mxu0 0.0
    %237 = vmatprep.subr.mxu0 0.0
    %238 = vmatpush1.msra.mxu0 0.0
    %239 = vmatprep.subr.mxu0 0.0
    %240 = vmatpush1.msra.mxu0 0.0
    %241 = vmatprep.subr.mxu0 0.0
    %242 = vmatpush1.msra.mxu0 0.0
    %243 = vmatprep.subr.mxu0 0.0
    %244 = vmatpush1.msra.mxu0 0.0
    %245 = vmatprep.subr.mxu0 0.0
    %246 = vmatpush1.msra.mxu0 0.0
    %247 = vmatprep.subr.mxu0 0.0
    %248 = vmatpush1.msra.mxu0 0.0
    %249 = vmatprep.subr.mxu0 0.0
    %250 = vmatpush1.msra.mxu0 0.0
    %251 = vmatprep.subr.mxu0 0.0
    %252 = vmatpush1.msra.mxu0 0.0
    %253 = vmatprep.subr.mxu0 0.0
    %254 = vmatpush1.msra.mxu0 0.0
    %255 = vmatprep.subr.mxu0 0.0
    %256 = vmatpush1.msra.mxu0 0.0
    %257 = vmatprep.mubr.f32.mxu0 0.0
    %258 = vmatmul.mubr.f32.gmra.mrb[0].mxu0 %v188
    %v259 = vpop.f32.mrb[0].mxu0
    %v260 = vadd.f32 %v186, %v259
    %v261 = vpop.f32.mrb[0].mxu0
    %262 = vmatprep.mubr.f32.mxu0 0.0
    %263 = vmatmul.mubr.f32.gmra.mrb[0].mxu0 %v191
    %v264 = vpop.f32.mrb[0].mxu0
    %v265 = vadd.f32 %v186, %v264
    %v266 = vpop.f32.mrb[0].mxu0
    %267 = vdwg.mxu0
    %v268 = vmax.f32 %v260, 0.0
    %v269 = vmax.f32 %v265, 0.0
    %v270 = vmul.f32 %v268, %v268
    %v271 = vmul.f32 %v269, %v269
    %v272 = vld [vmem:[#allocation4 + $0x8] sm:$0x1]
    %273 = vadd.xlane.f32.xlu0 %v270
    %v274 = vpop.xlane.xlu0 %273
    %275 = vadd.xlane.f32.xlu0 %v271
    %v276 = vpop.xlane.xlu0 %275
    %v277 = vmul.f32 %v270, %v270
    %v278 = vmul.f32 %v271, %v271
    %279 = vadd.xlane.f32.xlu0 %v277
    %v280 = vpop.xlane.xlu0 %279
    %281 = vadd.xlane.f32.xlu0 %v278
    %v282 = vpop.xlane.xlu0 %281
    %v283 = vmul.f32 %v274, 0.0078125
    %v284 = vmul.f32 %v276, 0.0078125
    %v285 = vmul.f32 %v280, 0.0078125
    %v286 = vmul.f32 %v282, 0.0078125
    %v287 = vmul.f32 %v283, %v283
    %v288 = vmul.f32 %v284, %v284
    %v289 = vsub.f32 %v285, %v287
    %v290 = vsub.f32 %v286, %v288
    %v291 = vsub.f32 %v270, %v283
    %v292 = vsub.f32 %v271, %v284
    %v293 = vadd.f32 %v289, 1e-05
    %v294 = vadd.f32 %v290, 1e-05
    %v295 = vrsqrt.pop %v293
    %v296 = vrsqrt.pop %v294
    %v297 = vmul.f32 %v291, %v295
    %v298 = vmul.f32 %v292, %v296
    %v299 = vlaneseq
    %v300 = vshrl.u32 %v299, 7
    %v301 = vsub.s32 0, %v300
    %v302 = vrot.slane %v272, %v301
    %v303 = vmul.f32 %v297, %v302
    %v304 = vmul.f32 %v298, %v302
    %v305 = vld [vmem:[#allocation4 + $0x1c8] sm:$0xff]
    %v306 = vld [vmem:[#allocation4 + $0x1d0] sm:$0xff]
    %v307 = vld [vmem:[#allocation4 + $0x1d8] sm:$0xff]
    %v308 = vld [vmem:[#allocation4 + $0x1e0] sm:$0xff]
    %v309 = vld [vmem:[#allocation4 + $0x1e8] sm:$0xff]
    %v310 = vld [vmem:[#allocation4 + $0x1f0] sm:$0xff]
    %v311 = vld [vmem:[#allocation4 + $0x1f8] sm:$0xff]
    %v312 = vld [vmem:[#allocation4 + $0x200] sm:$0xff]
    %v313 = vld [vmem:[#allocation4 + $0x208] sm:$0xff]
    %v314 = vld [vmem:[#allocation4 + $0x210] sm:$0xff]
    %v315 = vld [vmem:[#allocation4 + $0x218] sm:$0xff]
    %v316 = vld [vmem:[#allocation4 + $0x220] sm:$0xff]
    %v317 = vld [vmem:[#allocation4 + $0x228] sm:$0xff]
    %v318 = vld [vmem:[#allocation4 + $0x230] sm:$0xff]
    %v319 = vld [vmem:[#allocation4 + $0x238] sm:$0xff]
    %v320 = vld [vmem:[#allocation4 + $0x240] sm:$0xff]
    %v321 = vld [vmem:[#allocation4 + $0xe] sm:$0x1]
    %v322 = vlaneseq
    %v323 = vshrl.u32 %v322, 7
    %v324 = vsub.s32 0, %v323
    %v325 = vrot.slane %v321, %v324
    %326 = vmatprep.subr.mxu0 0.0
    %327 = vmatpush1.msra.mxu0 %v305
    %328 = vmatprep.subr.mxu0 0.0
    %329 = vmatpush1.msra.mxu0 %v306
    %330 = vmatprep.subr.mxu0 0.0
    %331 = vmatpush1.msra.mxu0 %v307
    %332 = vmatprep.subr.mxu0 0.0
    %333 = vmatpush1.msra.mxu0 %v308
    %334 = vmatprep.subr.mxu0 0.0
    %335 = vmatpush1.msra.mxu0 %v309
    %336 = vmatprep.subr.mxu0 0.0
    %337 = vmatpush1.msra.mxu0 %v310
    %338 = vmatprep.subr.mxu0 0.0
    %339 = vmatpush1.msra.mxu0 %v311
    %340 = vmatprep.subr.mxu0 0.0
    %341 = vmatpush1.msra.mxu0 %v312
    %342 = vmatprep.subr.mxu0 0.0
    %343 = vmatpush1.msra.mxu0 %v313
    %344 = vmatprep.subr.mxu0 0.0
    %345 = vmatpush1.msra.mxu0 %v314
    %346 = vmatprep.subr.mxu0 0.0
    %347 = vmatpush1.msra.mxu0 %v315
    %348 = vmatprep.subr.mxu0 0.0
    %349 = vmatpush1.msra.mxu0 %v316
    %350 = vmatprep.subr.mxu0 0.0
    %351 = vmatpush1.msra.mxu0 %v317
    %352 = vmatprep.subr.mxu0 0.0
    %353 = vmatpush1.msra.mxu0 %v318
    %354 = vmatprep.subr.mxu0 0.0
    %355 = vmatpush1.msra.mxu0 %v319
    %356 = vmatprep.subr.mxu0 0.0
    %357 = vmatpush1.msra.mxu0 %v320
    %358 = vmatprep.subr.mxu0 0.0
    %359 = vmatpush1.msra.mxu0 0.0
    %360 = vmatprep.subr.mxu0 0.0
    %361 = vmatpush1.msra.mxu0 0.0
    %362 = vmatprep.subr.mxu0 0.0
    %363 = vmatpush1.msra.mxu0 0.0
    %364 = vmatprep.subr.mxu0 0.0
    %365 = vmatpush1.msra.mxu0 0.0
    %366 = vmatprep.subr.mxu0 0.0
    %367 = vmatpush1.msra.mxu0 0.0
    %368 = vmatprep.subr.mxu0 0.0
    %369 = vmatpush1.msra.mxu0 0.0
    %370 = vmatprep.subr.mxu0 0.0
    %371 = vmatpush1.msra.mxu0 0.0
    %372 = vmatprep.subr.mxu0 0.0
    %373 = vmatpush1.msra.mxu0 0.0
    %374 = vmatprep.subr.mxu0 0.0
    %375 = vmatpush1.msra.mxu0 0.0
    %376 = vmatprep.subr.mxu0 0.0
    %377 = vmatpush1.msra.mxu0 0.0
    %378 = vmatprep.subr.mxu0 0.0
    %379 = vmatpush1.msra.mxu0 0.0
    %380 = vmatprep.subr.mxu0 0.0
    %381 = vmatpush1.msra.mxu0 0.0
    %382 = vmatprep.subr.mxu0 0.0
    %383 = vmatpush1.msra.mxu0 0.0
    %384 = vmatprep.subr.mxu0 0.0
    %385 = vmatpush1.msra.mxu0 0.0
    %386 = vmatprep.subr.mxu0 0.0
    %387 = vmatpush1.msra.mxu0 0.0
    %388 = vmatprep.subr.mxu0 0.0
    %389 = vmatpush1.msra.mxu0 0.0
    %390 = vmatprep.mubr.f32.mxu0 0.0
    %391 = vmatmul.mubr.f32.gmra.mrb[0].mxu0 %v303
    %v392 = vpop.f32.mrb[0].mxu0
    %v393 = vadd.f32 %v325, %v392
    %v394 = vpop.f32.mrb[0].mxu0
    %395 = vmatprep.mubr.f32.mxu0 0.0
    %396 = vmatmul.mubr.f32.gmra.mrb[0].mxu0 %v304
    %v397 = vpop.f32.mrb[0].mxu0
    %v398 = vadd.f32 %v325, %v397
    %v399 = vpop.f32.mrb[0].mxu0
    %400 = vdwg.mxu0
    %v401 = vld [vmem:[#allocation4 + $0x14] sm:$0x1]
    %v402 = vsel %vm137, %v393, 0.0
    %403 = vadd.xlane.f32.xlu0 %v402
    %v404 = vpop.xlane.xlu0 %403
    %v405 = vsel %vm137, %v398, 0.0
    %406 = vadd.xlane.f32.xlu0 %v405
    %v407 = vpop.xlane.xlu0 %406
    %v408 = vmul.f32 %v393, %v393
    %v409 = vmul.f32 %v398, %v398
    %v410 = vsel %vm137, %v408, 0.0
    %411 = vadd.xlane.f32.xlu0 %v410
    %v412 = vpop.xlane.xlu0 %411
    %v413 = vsel %vm137, %v409, 0.0
    %414 = vadd.xlane.f32.xlu0 %v413
    %v415 = vpop.xlane.xlu0 %414
    %v416 = vmul.f32 %v404, 0.015625
    %v417 = vmul.f32 %v407, 0.015625
    %v418 = vmul.f32 %v412, 0.015625
    %v419 = vmul.f32 %v415, 0.015625
    %v420 = vmul.f32 %v416, %v416
    %v421 = vmul.f32 %v417, %v417
    %v422 = vsub.f32 %v418, %v420
    %v423 = vsub.f32 %v419, %v421
    %v424 = vsub.f32 %v393, %v416
    %v425 = vsub.f32 %v398, %v417
    %v426 = vadd.f32 %v422, 1e-05
    %v427 = vadd.f32 %v423, 1e-05
    %v428 = vrsqrt.pop %v426
    %v429 = vrsqrt.pop %v427
    %v430 = vmul.f32 %v424, %v428
    %v431 = vmul.f32 %v425, %v429
    %v432 = vlaneseq
    %v433 = vshrl.u32 %v432, 7
    %v434 = vsub.s32 0, %v433
    %v435 = vrot.slane %v401, %v434
    %v436 = vmul.f32 %v430, %v435
    %v437 = vmul.f32 %v431, %v435
    %v438 = vld [vmem:[#allocation4 + $0x1a] sm:$0x1]
    %v439 = vlaneseq
    %v440 = vshrl.u32 %v439, 7
    %v441 = vsub.s32 0, %v440
    %v442 = vrot.slane %v438, %v441
    %v443 = vmul.f32 %v172, %v442
    %v444 = vmul.f32 %v173, %v442
    %v445 = vadd.f32 %v443, %v436
    %v446 = vadd.f32 %v444, %v437
    %v447 = vld [vmem:[#allocation4 + $0x88] sm:$0xff]
    %v448 = vld [vmem:[#allocation4 + $0x90] sm:$0xff]
    %v449 = vld [vmem:[#allocation4 + $0x98] sm:$0xff]
    %v450 = vld [vmem:[#allocation4 + $0xa0] sm:$0xff]
    %v451 = vld [vmem:[#allocation4 + $0xa8] sm:$0xff]
    %v452 = vld [vmem:[#allocation4 + $0xb0] sm:$0xff]
    %v453 = vld [vmem:[#allocation4 + $0xb8] sm:$0xff]
    %v454 = vld [vmem:[#allocation4 + $0xc0] sm:$0xff]
    %v455 = vld [vmem:[#allocation4 + $0x3] sm:$0x1]
    %v456 = vlaneseq
    %v457 = vshrl.u32 %v456, 7
    %v458 = vsub.s32 0, %v457
    %v459 = vrot.slane %v455, %v458
    %v461 = vsel %vm137, %v445, 0
    %v464 = vsel %vm137, %v446, 0
    %466 = vmatprep.subr.mxu0 0.0
    %467 = vmatpush1.msra.mxu0 %v447
    %468 = vmatprep.subr.mxu0 0.0
    %469 = vmatpush1.msra.mxu0 %v448
    %470 = vmatprep.subr.mxu0 0.0
    %471 = vmatpush1.msra.mxu0 %v449
    %472 = vmatprep.subr.mxu0 0.0
    %473 = vmatpush1.msra.mxu0 %v450
    %474 = vmatprep.subr.mxu0 0.0
    %475 = vmatpush1.msra.mxu0 %v451
    %476 = vmatprep.subr.mxu0 0.0
    %477 = vmatpush1.msra.mxu0 %v452
    %478 = vmatprep.subr.mxu0 0.0
    %479 = vmatpush1.msra.mxu0 %v453
    %480 = vmatprep.subr.mxu0 0.0
    %481 = vmatpush1.msra.mxu0 %v454
    %482 = vmatprep.subr.mxu0 0.0
    %483 = vmatpush1.msra.mxu0 0.0
    %484 = vmatprep.subr.mxu0 0.0
    %485 = vmatpush1.msra.mxu0 0.0
    %486 = vmatprep.subr.mxu0 0.0
    %487 = vmatpush1.msra.mxu0 0.0
    %488 = vmatprep.subr.mxu0 0.0
    %489 = vmatpush1.msra.mxu0 0.0
    %490 = vmatprep.subr.mxu0 0.0
    %491 = vmatpush1.msra.mxu0 0.0
    %492 = vmatprep.subr.mxu0 0.0
    %493 = vmatpush1.msra.mxu0 0.0
    %494 = vmatprep.subr.mxu0 0.0
    %495 = vmatpush1.msra.mxu0 0.0
    %496 = vmatprep.subr.mxu0 0.0
    %497 = vmatpush1.msra.mxu0 0.0
    %498 = vmatprep.subr.mxu0 0.0
    %499 = vmatpush1.msra.mxu0 0.0
    %500 = vmatprep.subr.mxu0 0.0
    %501 = vmatpush1.msra.mxu0 0.0
    %502 = vmatprep.subr.mxu0 0.0
    %503 = vmatpush1.msra.mxu0 0.0
    %504 = vmatprep.subr.mxu0 0.0
    %505 = vmatpush1.msra.mxu0 0.0
    %506 = vmatprep.subr.mxu0 0.0
    %507 = vmatpush1.msra.mxu0 0.0
    %508 = vmatprep.subr.mxu0 0.0
    %509 = vmatpush1.msra.mxu0 0.0
    %510 = vmatprep.subr.mxu0 0.0
    %511 = vmatpush1.msra.mxu0 0.0
    %512 = vmatprep.subr.mxu0 0.0
    %513 = vmatpush1.msra.mxu0 0.0
    %514 = vmatprep.subr.mxu0 0.0
    %515 = vmatpush1.msra.mxu0 0.0
    %516 = vmatprep.subr.mxu0 0.0
    %517 = vmatpush1.msra.mxu0 0.0
    %518 = vmatprep.subr.mxu0 0.0
    %519 = vmatpush1.msra.mxu0 0.0
    %520 = vmatprep.subr.mxu0 0.0
    %521 = vmatpush1.msra.mxu0 0.0
    %522 = vmatprep.subr.mxu0 0.0
    %523 = vmatpush1.msra.mxu0 0.0
    %524 = vmatprep.subr.mxu0 0.0
    %525 = vmatpush1.msra.mxu0 0.0
    %526 = vmatprep.subr.mxu0 0.0
    %527 = vmatpush1.msra.mxu0 0.0
    %528 = vmatprep.subr.mxu0 0.0
    %529 = vmatpush1.msra.mxu0 0.0
    %530 = vmatprep.mubr.f32.mxu0 0.0
    %531 = vmatmul.mubr.f32.gmra.mrb[0].mxu0 %v461
    %v532 = vpop.f32.mrb[0].mxu0
    %v533 = vadd.f32 %v459, %v532
    %v534 = vpop.f32.mrb[0].mxu0
    %535 = vmatprep.mubr.f32.mxu0 0.0
    %536 = vmatmul.mubr.f32.gmra.mrb[0].mxu0 %v464
    %v537 = vpop.f32.mrb[0].mxu0
    %v538 = vadd.f32 %v459, %v537
    %v539 = vpop.f32.mrb[0].mxu0
    %540 = vdwg.mxu0
    %v541 = vmax.f32 %v533, 0.0
    %v542 = vmax.f32 %v538, 0.0
    %v543 = vmul.f32 %v541, %v541
    %v544 = vmul.f32 %v542, %v542
    %v545 = vld [vmem:[#allocation4 + $0x9] sm:$0x1]
    %546 = vadd.xlane.f32.xlu0 %v543
    %v547 = vpop.xlane.xlu0 %546
    %548 = vadd.xlane.f32.xlu0 %v544
    %v549 = vpop.xlane.xlu0 %548
    %v550 = vmul.f32 %v543, %v543
    %v551 = vmul.f32 %v544, %v544
    %552 = vadd.xlane.f32.xlu0 %v550
    %v553 = vpop.xlane.xlu0 %552
    %554 = vadd.xlane.f32.xlu0 %v551
    %v555 = vpop.xlane.xlu0 %554
    %v556 = vmul.f32 %v547, 0.0078125
    %v557 = vmul.f32 %v549, 0.0078125
    %v558 = vmul.f32 %v553, 0.0078125
    %v559 = vmul.f32 %v555, 0.0078125
    %v560 = vmul.f32 %v556, %v556
    %v561 = vmul.f32 %v557, %v557
    %v562 = vsub.f32 %v558, %v560
    %v563 = vsub.f32 %v559, %v561
    %v564 = vsub.f32 %v543, %v556
    %v565 = vsub.f32 %v544, %v557
    %v566 = vadd.f32 %v562, 1e-05
    %v567 = vadd.f32 %v563, 1e-05
    %v568 = vrsqrt.pop %v566
    %v569 = vrsqrt.pop %v567
    %v570 = vmul.f32 %v564, %v568
    %v571 = vmul.f32 %v565, %v569
    %v572 = vlaneseq
    %v573 = vshrl.u32 %v572, 7
    %v574 = vsub.s32 0, %v573
    %v575 = vrot.slane %v545, %v574
    %v576 = vmul.f32 %v570, %v575
    %v577 = vmul.f32 %v571, %v575
    %v578 = vld [vmem:[#allocation4 + $0x248] sm:$0xff]
    %v579 = vld [vmem:[#allocation4 + $0x250] sm:$0xff]
    %v580 = vld [vmem:[#allocation4 + $0x258] sm:$0xff]
    %v581 = vld [vmem:[#allocation4 + $0x260] sm:$0xff]
    %v582 = vld [vmem:[#allocation4 + $0x268] sm:$0xff]
    %v583 = vld [vmem:[#allocation4 + $0x270] sm:$0xff]
    %v584 = vld [vmem:[#allocation4 + $0x278] sm:$0xff]
    %v585 = vld [vmem:[#allocation4 + $0x280] sm:$0xff]
    %v586 = vld [vmem:[#allocation4 + $0x288] sm:$0xff]
    %v587 = vld [vmem:[#allocation4 + $0x290] sm:$0xff]
    %v588 = vld [vmem:[#allocation4 + $0x298] sm:$0xff]
    %v589 = vld [vmem:[#allocation4 + $0x2a0] sm:$0xff]
    %v590 = vld [vmem:[#allocation4 + $0x2a8] sm:$0xff]
    %v591 = vld [vmem:[#allocation4 + $0x2b0] sm:$0xff]
    %v592 = vld [vmem:[#allocation4 + $0x2b8] sm:$0xff]
    %v593 = vld [vmem:[#allocation4 + $0x2c0] sm:$0xff]
    %v594 = vld [vmem:[#allocation4 + $0xf] sm:$0x1]
    %v595 = vlaneseq
    %v596 = vshrl.u32 %v595, 7
    %v597 = vsub.s32 0, %v596
    %v598 = vrot.slane %v594, %v597
    %599 = vmatprep.subr.mxu0 0.0
    %600 = vmatpush1.msra.mxu0 %v578
    %601 = vmatprep.subr.mxu0 0.0
    %602 = vmatpush1.msra.mxu0 %v579
    %603 = vmatprep.subr.mxu0 0.0
    %604 = vmatpush1.msra.mxu0 %v580
    %605 = vmatprep.subr.mxu0 0.0
    %606 = vmatpush1.msra.mxu0 %v581
    %607 = vmatprep.subr.mxu0 0.0
    %608 = vmatpush1.msra.mxu0 %v582
    %609 = vmatprep.subr.mxu0 0.0
    %610 = vmatpush1.msra.mxu0 %v583
    %611 = vmatprep.subr.mxu0 0.0
    %612 = vmatpush1.msra.mxu0 %v584
    %613 = vmatprep.subr.mxu0 0.0
    %614 = vmatpush1.msra.mxu0 %v585
    %615 = vmatprep.subr.mxu0 0.0
    %616 = vmatpush1.msra.mxu0 %v586
    %617 = vmatprep.subr.mxu0 0.0
    %618 = vmatpush1.msra.mxu0 %v587
    %619 = vmatprep.subr.mxu0 0.0
    %620 = vmatpush1.msra.mxu0 %v588
    %621 = vmatprep.subr.mxu0 0.0
    %622 = vmatpush1.msra.mxu0 %v589
    %623 = vmatprep.subr.mxu0 0.0
    %624 = vmatpush1.msra.mxu0 %v590
    %625 = vmatprep.subr.mxu0 0.0
    %626 = vmatpush1.msra.mxu0 %v591
    %627 = vmatprep.subr.mxu0 0.0
    %628 = vmatpush1.msra.mxu0 %v592
    %629 = vmatprep.subr.mxu0 0.0
    %630 = vmatpush1.msra.mxu0 %v593
    %631 = vmatprep.subr.mxu0 0.0
    %632 = vmatpush1.msra.mxu0 0.0
    %633 = vmatprep.subr.mxu0 0.0
    %634 = vmatpush1.msra.mxu0 0.0
    %635 = vmatprep.subr.mxu0 0.0
    %636 = vmatpush1.msra.mxu0 0.0
    %637 = vmatprep.subr.mxu0 0.0
    %638 = vmatpush1.msra.mxu0 0.0
    %639 = vmatprep.subr.mxu0 0.0
    %640 = vmatpush1.msra.mxu0 0.0
    %641 = vmatprep.subr.mxu0 0.0
    %642 = vmatpush1.msra.mxu0 0.0
    %643 = vmatprep.subr.mxu0 0.0
    %644 = vmatpush1.msra.mxu0 0.0
    %645 = vmatprep.subr.mxu0 0.0
    %646 = vmatpush1.msra.mxu0 0.0
    %647 = vmatprep.subr.mxu0 0.0
    %648 = vmatpush1.msra.mxu0 0.0
    %649 = vmatprep.subr.mxu0 0.0
    %650 = vmatpush1.msra.mxu0 0.0
    %651 = vmatprep.subr.mxu0 0.0
    %652 = vmatpush1.msra.mxu0 0.0
    %653 = vmatprep.subr.mxu0 0.0
    %654 = vmatpush1.msra.mxu0 0.0
    %655 = vmatprep.subr.mxu0 0.0
    %656 = vmatpush1.msra.mxu0 0.0
    %657 = vmatprep.subr.mxu0 0.0
    %658 = vmatpush1.msra.mxu0 0.0
    %659 = vmatprep.subr.mxu0 0.0
    %660 = vmatpush1.msra.mxu0 0.0
    %661 = vmatprep.subr.mxu0 0.0
    %662 = vmatpush1.msra.mxu0 0.0
    %663 = vmatprep.mubr.f32.mxu0 0.0
    %664 = vmatmul.mubr.f32.gmra.mrb[0].mxu0 %v576
    %v665 = vpop.f32.mrb[0].mxu0
    %v666 = vadd.f32 %v598, %v665
    %v667 = vpop.f32.mrb[0].mxu0
    %668 = vmatprep.mubr.f32.mxu0 0.0
    %669 = vmatmul.mubr.f32.gmra.mrb[0].mxu0 %v577
    %v670 = vpop.f32.mrb[0].mxu0
    %v671 = vadd.f32 %v598, %v670
    %v672 = vpop.f32.mrb[0].mxu0
    %673 = vdwg.mxu0
    %v674 = vld [vmem:[#allocation4 + $0x15] sm:$0x1]
    %v675 = vsel %vm137, %v666, 0.0
    %676 = vadd.xlane.f32.xlu0 %v675
    %v677 = vpop.xlane.xlu0 %676
    %v678 = vsel %vm137, %v671, 0.0
    %679 = vadd.xlane.f32.xlu0 %v678
    %v680 = vpop.xlane.xlu0 %679
    %v681 = vmul.f32 %v666, %v666
    %v682 = vmul.f32 %v671, %v671
    %v683 = vsel %vm137, %v681, 0.0
    %684 = vadd.xlane.f32.xlu0 %v683
    %v685 = vpop.xlane.xlu0 %684
    %v686 = vsel %vm137, %v682, 0.0
    %687 = vadd.xlane.f32.xlu0 %v686
    %v688 = vpop.xlane.xlu0 %687
    %v689 = vmul.f32 %v677, 0.015625
    %v690 = vmul.f32 %v680, 0.015625
    %v691 = vmul.f32 %v685, 0.015625
    %v692 = vmul.f32 %v688, 0.015625
    %v693 = vmul.f32 %v689, %v689
    %v694 = vmul.f32 %v690, %v690
    %v695 = vsub.f32 %v691, %v693
    %v696 = vsub.f32 %v692, %v694
    %v697 = vsub.f32 %v666, %v689
    %v698 = vsub.f32 %v671, %v690
    %v699 = vadd.f32 %v695, 1e-05
    %v700 = vadd.f32 %v696, 1e-05
    %v701 = vrsqrt.pop %v699
    %v702 = vrsqrt.pop %v700
    %v703 = vmul.f32 %v697, %v701
    %v704 = vmul.f32 %v698, %v702
    %v705 = vlaneseq
    %v706 = vshrl.u32 %v705, 7
    %v707 = vsub.s32 0, %v706
    %v708 = vrot.slane %v674, %v707
    %v709 = vmul.f32 %v703, %v708
    %v710 = vmul.f32 %v704, %v708
    %v711 = vld [vmem:[#allocation4 + $0x1b] sm:$0x1]
    %v712 = vlaneseq
    %v713 = vshrl.u32 %v712, 7
    %v714 = vsub.s32 0, %v713
    %v715 = vrot.slane %v711, %v714
    %v716 = vmul.f32 %v445, %v715
    %v717 = vmul.f32 %v446, %v715
    %v718 = vadd.f32 %v716, %v709
    %v719 = vadd.f32 %v717, %v710
    %v720 = vld [vmem:[#allocation4 + $0xc8] sm:$0xff]
    %v721 = vld [vmem:[#allocation4 + $0xd0] sm:$0xff]
    %v722 = vld [vmem:[#allocation4 + $0xd8] sm:$0xff]
    %v723 = vld [vmem:[#allocation4 + $0xe0] sm:$0xff]
    %v724 = vld [vmem:[#allocation4 + $0xe8] sm:$0xff]
    %v725 = vld [vmem:[#allocation4 + $0xf0] sm:$0xff]
    %v726 = vld [vmem:[#allocation4 + $0xf8] sm:$0xff]
    %v727 = vld [vmem:[#allocation4 + $0x100] sm:$0xff]
    %v728 = vld [vmem:[#allocation4 + $0x4] sm:$0x1]
    %v729 = vlaneseq
    %v730 = vshrl.u32 %v729, 7
    %v731 = vsub.s32 0, %v730
    %v732 = vrot.slane %v728, %v731
    %v734 = vsel %vm137, %v718, 0
    %v737 = vsel %vm137, %v719, 0
    %739 = vmatprep.subr.mxu0 0.0
    %740 = vmatpush1.msra.mxu0 %v720
    %741 = vmatprep.subr.mxu0 0.0
    %742 = vmatpush1.msra.mxu0 %v721
    %743 = vmatprep.subr.mxu0 0.0
    %744 = vmatpush1.msra.mxu0 %v722
    %745 = vmatprep.subr.mxu0 0.0
    %746 = vmatpush1.msra.mxu0 %v723
    %747 = vmatprep.subr.mxu0 0.0
    %748 = vmatpush1.msra.mxu0 %v724
    %749 = vmatprep.subr.mxu0 0.0
    %750 = vmatpush1.msra.mxu0 %v725
    %751 = vmatprep.subr.mxu0 0.0
    %752 = vmatpush1.msra.mxu0 %v726
    %753 = vmatprep.subr.mxu0 0.0
    %754 = vmatpush1.msra.mxu0 %v727
    %755 = vmatprep.subr.mxu0 0.0
    %756 = vmatpush1.msra.mxu0 0.0
    %757 = vmatprep.subr.mxu0 0.0
    %758 = vmatpush1.msra.mxu0 0.0
    %759 = vmatprep.subr.mxu0 0.0
    %760 = vmatpush1.msra.mxu0 0.0
    %761 = vmatprep.subr.mxu0 0.0
    %762 = vmatpush1.msra.mxu0 0.0
    %763 = vmatprep.subr.mxu0 0.0
    %764 = vmatpush1.msra.mxu0 0.0
    %765 = vmatprep.subr.mxu0 0.0
    %766 = vmatpush1.msra.mxu0 0.0
    %767 = vmatprep.subr.mxu0 0.0
    %768 = vmatpush1.msra.mxu0 0.0
    %769 = vmatprep.subr.mxu0 0.0
    %770 = vmatpush1.msra.mxu0 0.0
    %771 = vmatprep.subr.mxu0 0.0
    %772 = vmatpush1.msra.mxu0 0.0
    %773 = vmatprep.subr.mxu0 0.0
    %774 = vmatpush1.msra.mxu0 0.0
    %775 = vmatprep.subr.mxu0 0.0
    %776 = vmatpush1.msra.mxu0 0.0
    %777 = vmatprep.subr.mxu0 0.0
    %778 = vmatpush1.msra.mxu0 0.0
    %779 = vmatprep.subr.mxu0 0.0
    %780 = vmatpush1.msra.mxu0 0.0
    %781 = vmatprep.subr.mxu0 0.0
    %782 = vmatpush1.msra.mxu0 0.0
    %783 = vmatprep.subr.mxu0 0.0
    %784 = vmatpush1.msra.mxu0 0.0
    %785 = vmatprep.subr.mxu0 0.0
    %786 = vmatpush1.msra.mxu0 0.0
    %787 = vmatprep.subr.mxu0 0.0
    %788 = vmatpush1.msra.mxu0 0.0
    %789 = vmatprep.subr.mxu0 0.0
    %790 = vmatpush1.msra.mxu0 0.0
    %791 = vmatprep.subr.mxu0 0.0
    %792 = vmatpush1.msra.mxu0 0.0
    %793 = vmatprep.subr.mxu0 0.0
    %794 = vmatpush1.msra.mxu0 0.0
    %795 = vmatprep.subr.mxu0 0.0
    %796 = vmatpush1.msra.mxu0 0.0
    %797 = vmatprep.subr.mxu0 0.0
    %798 = vmatpush1.msra.mxu0 0.0
    %799 = vmatprep.subr.mxu0 0.0
    %800 = vmatpush1.msra.mxu0 0.0
    %801 = vmatprep.subr.mxu0 0.0
    %802 = vmatpush1.msra.mxu0 0.0
    %803 = vmatprep.mubr.f32.mxu0 0.0
    %804 = vmatmul.mubr.f32.gmra.mrb[0].mxu0 %v734
    %v805 = vpop.f32.mrb[0].mxu0
    %v806 = vadd.f32 %v732, %v805
    %v807 = vpop.f32.mrb[0].mxu0
    %808 = vmatprep.mubr.f32.mxu0 0.0
    %809 = vmatmul.mubr.f32.gmra.mrb[0].mxu0 %v737
    %v810 = vpop.f32.mrb[0].mxu0
    %v811 = vadd.f32 %v732, %v810
    %v812 = vpop.f32.mrb[0].mxu0
    %813 = vdwg.mxu0
    %v814 = vmax.f32 %v806, 0.0
    %v815 = vmax.f32 %v811, 0.0
    %v816 = vmul.f32 %v814, %v814
    %v817 = vmul.f32 %v815, %v815
    %v818 = vld [vmem:[#allocation4 + $0xa] sm:$0x1]
    %819 = vadd.xlane.f32.xlu0 %v816
    %v820 = vpop.xlane.xlu0 %819
    %821 = vadd.xlane.f32.xlu0 %v817
    %v822 = vpop.xlane.xlu0 %821
    %v823 = vmul.f32 %v816, %v816
    %v824 = vmul.f32 %v817, %v817
    %825 = vadd.xlane.f32.xlu0 %v823
    %v826 = vpop.xlane.xlu0 %825
    %827 = vadd.xlane.f32.xlu0 %v824
    %v828 = vpop.xlane.xlu0 %827
    %v829 = vmul.f32 %v820, 0.0078125
    %v830 = vmul.f32 %v822, 0.0078125
    %v831 = vmul.f32 %v826, 0.0078125
    %v832 = vmul.f32 %v828, 0.0078125
    %v833 = vmul.f32 %v829, %v829
    %v834 = vmul.f32 %v830, %v830
    %v835 = vsub.f32 %v831, %v833
    %v836 = vsub.f32 %v832, %v834
    %v837 = vsub.f32 %v816, %v829
    %v838 = vsub.f32 %v817, %v830
    %v839 = vadd.f32 %v835, 1e-05
    %v840 = vadd.f32 %v836, 1e-05
    %v841 = vrsqrt.pop %v839
    %v842 = vrsqrt.pop %v840
    %v843 = vmul.f32 %v837, %v841
    %v844 = vmul.f32 %v838, %v842
    %v845 = vlaneseq
    %v846 = vshrl.u32 %v845, 7
    %v847 = vsub.s32 0, %v846
    %v848 = vrot.slane %v818, %v847
    %v849 = vmul.f32 %v843, %v848
    %v850 = vmul.f32 %v844, %v848
    %v851 = vld [vmem:[#allocation4 + $0x2c8] sm:$0xff]
    %v852 = vld [vmem:[#allocation4 + $0x2d0] sm:$0xff]
    %v853 = vld [vmem:[#allocation4 + $0x2d8] sm:$0xff]
    %v854 = vld [vmem:[#allocation4 + $0x2e0] sm:$0xff]
    %v855 = vld [vmem:[#allocation4 + $0x2e8] sm:$0xff]
    %v856 = vld [vmem:[#allocation4 + $0x2f0] sm:$0xff]
    %v857 = vld [vmem:[#allocation4 + $0x2f8] sm:$0xff]
    %v858 = vld [vmem:[#allocation4 + $0x300] sm:$0xff]
    %v859 = vld [vmem:[#allocation4 + $0x308] sm:$0xff]
    %v860 = vld [vmem:[#allocation4 + $0x310] sm:$0xff]
    %v861 = vld [vmem:[#allocation4 + $0x318] sm:$0xff]
    %v862 = vld [vmem:[#allocation4 + $0x320] sm:$0xff]
    %v863 = vld [vmem:[#allocation4 + $0x328] sm:$0xff]
    %v864 = vld [vmem:[#allocation4 + $0x330] sm:$0xff]
    %v865 = vld [vmem:[#allocation4 + $0x338] sm:$0xff]
    %v866 = vld [vmem:[#allocation4 + $0x340] sm:$0xff]
    %v867 = vld [vmem:[#allocation4 + $0x10] sm:$0x1]
    %v868 = vlaneseq
    %v869 = vshrl.u32 %v868, 7
    %v870 = vsub.s32 0, %v869
    %v871 = vrot.slane %v867, %v870
    %872 = vmatprep.subr.mxu0 0.0
    %873 = vmatpush1.msra.mxu0 %v851
    %874 = vmatprep.subr.mxu0 0.0
    %875 = vmatpush1.msra.mxu0 %v852
    %876 = vmatprep.subr.mxu0 0.0
    %877 = vmatpush1.msra.mxu0 %v853
    %878 = vmatprep.subr.mxu0 0.0
    %879 = vmatpush1.msra.mxu0 %v854
    %880 = vmatprep.subr.mxu0 0.0
    %881 = vmatpush1.msra.mxu0 %v855
    %882 = vmatprep.subr.mxu0 0.0
    %883 = vmatpush1.msra.mxu0 %v856
    %884 = vmatprep.subr.mxu0 0.0
    %885 = vmatpush1.msra.mxu0 %v857
    %886 = vmatprep.subr.mxu0 0.0
    %887 = vmatpush1.msra.mxu0 %v858
    %888 = vmatprep.subr.mxu0 0.0
    %889 = vmatpush1.msra.mxu0 %v859
    %890 = vmatprep.subr.mxu0 0.0
    %891 = vmatpush1.msra.mxu0 %v860
    %892 = vmatprep.subr.mxu0 0.0
    %893 = vmatpush1.msra.mxu0 %v861
    %894 = vmatprep.subr.mxu0 0.0
    %895 = vmatpush1.msra.mxu0 %v862
    %896 = vmatprep.subr.mxu0 0.0
    %897 = vmatpush1.msra.mxu0 %v863
    %898 = vmatprep.subr.mxu0 0.0
    %899 = vmatpush1.msra.mxu0 %v864
    %900 = vmatprep.subr.mxu0 0.0
    %901 = vmatpush1.msra.mxu0 %v865
    %902 = vmatprep.subr.mxu0 0.0
    %903 = vmatpush1.msra.mxu0 %v866
    %904 = vmatprep.subr.mxu0 0.0
    %905 = vmatpush1.msra.mxu0 0.0
    %906 = vmatprep.subr.mxu0 0.0
    %907 = vmatpush1.msra.mxu0 0.0
    %908 = vmatprep.subr.mxu0 0.0
    %909 = vmatpush1.msra.mxu0 0.0
    %910 = vmatprep.subr.mxu0 0.0
    %911 = vmatpush1.msra.mxu0 0.0
    %912 = vmatprep.subr.mxu0 0.0
    %913 = vmatpush1.msra.mxu0 0.0
    %914 = vmatprep.subr.mxu0 0.0
    %915 = vmatpush1.msra.mxu0 0.0
    %916 = vmatprep.subr.mxu0 0.0
    %917 = vmatpush1.msra.mxu0 0.0
    %918 = vmatprep.subr.mxu0 0.0
    %919 = vmatpush1.msra.mxu0 0.0
    %920 = vmatprep.subr.mxu0 0.0
    %921 = vmatpush1.msra.mxu0 0.0
    %922 = vmatprep.subr.mxu0 0.0
    %923 = vmatpush1.msra.mxu0 0.0
    %924 = vmatprep.subr.mxu0 0.0
    %925 = vmatpush1.msra.mxu0 0.0
    %926 = vmatprep.subr.mxu0 0.0
    %927 = vmatpush1.msra.mxu0 0.0
    %928 = vmatprep.subr.mxu0 0.0
    %929 = vmatpush1.msra.mxu0 0.0
    %930 = vmatprep.subr.mxu0 0.0
    %931 = vmatpush1.msra.mxu0 0.0
    %932 = vmatprep.subr.mxu0 0.0
    %933 = vmatpush1.msra.mxu0 0.0
    %934 = vmatprep.subr.mxu0 0.0
    %935 = vmatpush1.msra.mxu0 0.0
    %936 = vmatprep.mubr.f32.mxu0 0.0
    %937 = vmatmul.mubr.f32.gmra.mrb[0].mxu0 %v849
    %v938 = vpop.f32.mrb[0].mxu0
    %v939 = vadd.f32 %v871, %v938
    %v940 = vpop.f32.mrb[0].mxu0
    %941 = vmatprep.mubr.f32.mxu0 0.0
    %942 = vmatmul.mubr.f32.gmra.mrb[0].mxu0 %v850
    %v943 = vpop.f32.mrb[0].mxu0
    %v944 = vadd.f32 %v871, %v943
    %v945 = vpop.f32.mrb[0].mxu0
    %946 = vdwg.mxu0
    %v947 = vld [vmem:[#allocation4 + $0x16] sm:$0x1]
    %v948 = vsel %vm137, %v939, 0.0
    %949 = vadd.xlane.f32.xlu0 %v948
    %v950 = vpop.xlane.xlu0 %949
    %v951 = vsel %vm137, %v944, 0.0
    %952 = vadd.xlane.f32.xlu0 %v951
    %v953 = vpop.xlane.xlu0 %952
    %v954 = vmul.f32 %v939, %v939
    %v955 = vmul.f32 %v944, %v944
    %v956 = vsel %vm137, %v954, 0.0
    %957 = vadd.xlane.f32.xlu0 %v956
    %v958 = vpop.xlane.xlu0 %957
    %v959 = vsel %vm137, %v955, 0.0
    %960 = vadd.xlane.f32.xlu0 %v959
    %v961 = vpop.xlane.xlu0 %960
    %v962 = vmul.f32 %v950, 0.015625
    %v963 = vmul.f32 %v953, 0.015625
    %v964 = vmul.f32 %v958, 0.015625
    %v965 = vmul.f32 %v961, 0.015625
    %v966 = vmul.f32 %v962, %v962
    %v967 = vmul.f32 %v963, %v963
    %v968 = vsub.f32 %v964, %v966
    %v969 = vsub.f32 %v965, %v967
    %v970 = vsub.f32 %v939, %v962
    %v971 = vsub.f32 %v944, %v963
    %v972 = vadd.f32 %v968, 1e-05
    %v973 = vadd.f32 %v969, 1e-05
    %v974 = vrsqrt.pop %v972
    %v975 = vrsqrt.pop %v973
    %v976 = vmul.f32 %v970, %v974
    %v977 = vmul.f32 %v971, %v975
    %v978 = vlaneseq
    %v979 = vshrl.u32 %v978, 7
    %v980 = vsub.s32 0, %v979
    %v981 = vrot.slane %v947, %v980
    %v982 = vmul.f32 %v976, %v981
    %v983 = vmul.f32 %v977, %v981
    %v984 = vld [vmem:[#allocation4 + $0x1c] sm:$0x1]
    %v985 = vlaneseq
    %v986 = vshrl.u32 %v985, 7
    %v987 = vsub.s32 0, %v986
    %v988 = vrot.slane %v984, %v987
    %v989 = vmul.f32 %v718, %v988
    %v990 = vmul.f32 %v719, %v988
    %v991 = vadd.f32 %v989, %v982
    %v992 = vadd.f32 %v990, %v983
    %v993 = vld [vmem:[#allocation4 + $0x108] sm:$0xff]
    %v994 = vld [vmem:[#allocation4 + $0x110] sm:$0xff]
    %v995 = vld [vmem:[#allocation4 + $0x118] sm:$0xff]
    %v996 = vld [vmem:[#allocation4 + $0x120] sm:$0xff]
    %v997 = vld [vmem:[#allocation4 + $0x128] sm:$0xff]
    %v998 = vld [vmem:[#allocation4 + $0x130] sm:$0xff]
    %v999 = vld [vmem:[#allocation4 + $0x138] sm:$0xff]
    %v1000 = vld [vmem:[#allocation4 + $0x140] sm:$0xff]
    %v1001 = vld [vmem:[#allocation4 + $0x5] sm:$0x1]
    %v1002 = vlaneseq
    %v1003 = vshrl.u32 %v1002, 7
    %v1004 = vsub.s32 0, %v1003
    %v1005 = vrot.slane %v1001, %v1004
    %v1007 = vsel %vm137, %v991, 0
    %v1010 = vsel %vm137, %v992, 0
    %1012 = vmatprep.subr.mxu0 0.0
    %1013 = vmatpush1.msra.mxu0 %v993
    %1014 = vmatprep.subr.mxu0 0.0
    %1015 = vmatpush1.msra.mxu0 %v994
    %1016 = vmatprep.subr.mxu0 0.0
    %1017 = vmatpush1.msra.mxu0 %v995
    %1018 = vmatprep.subr.mxu0 0.0
    %1019 = vmatpush1.msra.mxu0 %v996
    %1020 = vmatprep.subr.mxu0 0.0
    %1021 = vmatpush1.msra.mxu0 %v997
    %1022 = vmatprep.subr.mxu0 0.0
    %1023 = vmatpush1.msra.mxu0 %v998
    %1024 = vmatprep.subr.mxu0 0.0
    %1025 = vmatpush1.msra.mxu0 %v999
    %1026 = vmatprep.subr.mxu0 0.0
    %1027 = vmatpush1.msra.mxu0 %v1000
    %1028 = vmatprep.subr.mxu0 0.0
    %1029 = vmatpush1.msra.mxu0 0.0
    %1030 = vmatprep.subr.mxu0 0.0
    %1031 = vmatpush1.msra.mxu0 0.0
    %1032 = vmatprep.subr.mxu0 0.0
    %1033 = vmatpush1.msra.mxu0 0.0
    %1034 = vmatprep.subr.mxu0 0.0
    %1035 = vmatpush1.msra.mxu0 0.0
    %1036 = vmatprep.subr.mxu0 0.0
    %1037 = vmatpush1.msra.mxu0 0.0
    %1038 = vmatprep.subr.mxu0 0.0
    %1039 = vmatpush1.msra.mxu0 0.0
    %1040 = vmatprep.subr.mxu0 0.0
    %1041 = vmatpush1.msra.mxu0 0.0
    %1042 = vmatprep.subr.mxu0 0.0
    %1043 = vmatpush1.msra.mxu0 0.0
    %1044 = vmatprep.subr.mxu0 0.0
    %1045 = vmatpush1.msra.mxu0 0.0
    %1046 = vmatprep.subr.mxu0 0.0
    %1047 = vmatpush1.msra.mxu0 0.0
    %1048 = vmatprep.subr.mxu0 0.0
    %1049 = vmatpush1.msra.mxu0 0.0
    %1050 = vmatprep.subr.mxu0 0.0
    %1051 = vmatpush1.msra.mxu0 0.0
    %1052 = vmatprep.subr.mxu0 0.0
    %1053 = vmatpush1.msra.mxu0 0.0
    %1054 = vmatprep.subr.mxu0 0.0
    %1055 = vmatpush1.msra.mxu0 0.0
    %1056 = vmatprep.subr.mxu0 0.0
    %1057 = vmatpush1.msra.mxu0 0.0
    %1058 = vmatprep.subr.mxu0 0.0
    %1059 = vmatpush1.msra.mxu0 0.0
    %1060 = vmatprep.subr.mxu0 0.0
    %1061 = vmatpush1.msra.mxu0 0.0
    %1062 = vmatprep.subr.mxu0 0.0
    %1063 = vmatpush1.msra.mxu0 0.0
    %1064 = vmatprep.subr.mxu0 0.0
    %1065 = vmatpush1.msra.mxu0 0.0
    %1066 = vmatprep.subr.mxu0 0.0
    %1067 = vmatpush1.msra.mxu0 0.0
    %1068 = vmatprep.subr.mxu0 0.0
    %1069 = vmatpush1.msra.mxu0 0.0
    %1070 = vmatprep.subr.mxu0 0.0
    %1071 = vmatpush1.msra.mxu0 0.0
    %1072 = vmatprep.subr.mxu0 0.0
    %1073 = vmatpush1.msra.mxu0 0.0
    %1074 = vmatprep.subr.mxu0 0.0
    %1075 = vmatpush1.msra.mxu0 0.0
    %1076 = vmatprep.mubr.f32.mxu0 0.0
    %1077 = vmatmul.mubr.f32.gmra.mrb[0].mxu0 %v1007
    %v1078 = vpop.f32.mrb[0].mxu0
    %v1079 = vadd.f32 %v1005, %v1078
    %v1080 = vpop.f32.mrb[0].mxu0
    %1081 = vmatprep.mubr.f32.mxu0 0.0
    %1082 = vmatmul.mubr.f32.gmra.mrb[0].mxu0 %v1010
    %v1083 = vpop.f32.mrb[0].mxu0
    %v1084 = vadd.f32 %v1005, %v1083
    %v1085 = vpop.f32.mrb[0].mxu0
    %1086 = vdwg.mxu0
    %v1087 = vmax.f32 %v1079, 0.0
    %v1088 = vmax.f32 %v1084, 0.0
    %v1089 = vmul.f32 %v1087, %v1087
    %v1090 = vmul.f32 %v1088, %v1088
    %v1091 = vld [vmem:[#allocation4 + $0xb] sm:$0x1]
    %1092 = vadd.xlane.f32.xlu0 %v1089
    %v1093 = vpop.xlane.xlu0 %1092
    %1094 = vadd.xlane.f32.xlu0 %v1090
    %v1095 = vpop.xlane.xlu0 %1094
    %v1096 = vmul.f32 %v1089, %v1089
    %v1097 = vmul.f32 %v1090, %v1090
    %1098 = vadd.xlane.f32.xlu0 %v1096
    %v1099 = vpop.xlane.xlu0 %1098
    %1100 = vadd.xlane.f32.xlu0 %v1097
    %v1101 = vpop.xlane.xlu0 %1100
    %v1102 = vmul.f32 %v1093, 0.0078125
    %v1103 = vmul.f32 %v1095, 0.0078125
    %v1104 = vmul.f32 %v1099, 0.0078125
    %v1105 = vmul.f32 %v1101, 0.0078125
    %v1106 = vmul.f32 %v1102, %v1102
    %v1107 = vmul.f32 %v1103, %v1103
    %v1108 = vsub.f32 %v1104, %v1106
    %v1109 = vsub.f32 %v1105, %v1107
    %v1110 = vsub.f32 %v1089, %v1102
    %v1111 = vsub.f32 %v1090, %v1103
    %v1112 = vadd.f32 %v1108, 1e-05
    %v1113 = vadd.f32 %v1109, 1e-05
    %v1114 = vrsqrt.pop %v1112
    %v1115 = vrsqrt.pop %v1113
    %v1116 = vmul.f32 %v1110, %v1114
    %v1117 = vmul.f32 %v1111, %v1115
    %v1118 = vlaneseq
    %v1119 = vshrl.u32 %v1118, 7
    %v1120 = vsub.s32 0, %v1119
    %v1121 = vrot.slane %v1091, %v1120
    %v1122 = vmul.f32 %v1116, %v1121
    %v1123 = vmul.f32 %v1117, %v1121
    %v1124 = vld [vmem:[#allocation4 + $0x348] sm:$0xff]
    %v1125 = vld [vmem:[#allocation4 + $0x350] sm:$0xff]
    %v1126 = vld [vmem:[#allocation4 + $0x358] sm:$0xff]
    %v1127 = vld [vmem:[#allocation4 + $0x360] sm:$0xff]
    %v1128 = vld [vmem:[#allocation4 + $0x368] sm:$0xff]
    %v1129 = vld [vmem:[#allocation4 + $0x370] sm:$0xff]
    %v1130 = vld [vmem:[#allocation4 + $0x378] sm:$0xff]
    %v1131 = vld [vmem:[#allocation4 + $0x380] sm:$0xff]
    %v1132 = vld [vmem:[#allocation4 + $0x388] sm:$0xff]
    %v1133 = vld [vmem:[#allocation4 + $0x390] sm:$0xff]
    %v1134 = vld [vmem:[#allocation4 + $0x398] sm:$0xff]
    %v1135 = vld [vmem:[#allocation4 + $0x3a0] sm:$0xff]
    %v1136 = vld [vmem:[#allocation4 + $0x3a8] sm:$0xff]
    %v1137 = vld [vmem:[#allocation4 + $0x3b0] sm:$0xff]
    %v1138 = vld [vmem:[#allocation4 + $0x3b8] sm:$0xff]
    %v1139 = vld [vmem:[#allocation4 + $0x3c0] sm:$0xff]
    %v1140 = vld [vmem:[#allocation4 + $0x11] sm:$0x1]
    %v1141 = vlaneseq
    %v1142 = vshrl.u32 %v1141, 7
    %v1143 = vsub.s32 0, %v1142
    %v1144 = vrot.slane %v1140, %v1143
    %1145 = vmatprep.subr.mxu0 0.0
    %1146 = vmatpush1.msra.mxu0 %v1124
    %1147 = vmatprep.subr.mxu0 0.0
    %1148 = vmatpush1.msra.mxu0 %v1125
    %1149 = vmatprep.subr.mxu0 0.0
    %1150 = vmatpush1.msra.mxu0 %v1126
    %1151 = vmatprep.subr.mxu0 0.0
    %1152 = vmatpush1.msra.mxu0 %v1127
    %1153 = vmatprep.subr.mxu0 0.0
    %1154 = vmatpush1.msra.mxu0 %v1128
    %1155 = vmatprep.subr.mxu0 0.0
    %1156 = vmatpush1.msra.mxu0 %v1129
    %1157 = vmatprep.subr.mxu0 0.0
    %1158 = vmatpush1.msra.mxu0 %v1130
    %1159 = vmatprep.subr.mxu0 0.0
    %1160 = vmatpush1.msra.mxu0 %v1131
    %1161 = vmatprep.subr.mxu0 0.0
    %1162 = vmatpush1.msra.mxu0 %v1132
    %1163 = vmatprep.subr.mxu0 0.0
    %1164 = vmatpush1.msra.mxu0 %v1133
    %1165 = vmatprep.subr.mxu0 0.0
    %1166 = vmatpush1.msra.mxu0 %v1134
    %1167 = vmatprep.subr.mxu0 0.0
    %1168 = vmatpush1.msra.mxu0 %v1135
    %1169 = vmatprep.subr.mxu0 0.0
    %1170 = vmatpush1.msra.mxu0 %v1136
    %1171 = vmatprep.subr.mxu0 0.0
    %1172 = vmatpush1.msra.mxu0 %v1137
    %1173 = vmatprep.subr.mxu0 0.0
    %1174 = vmatpush1.msra.mxu0 %v1138
    %1175 = vmatprep.subr.mxu0 0.0
    %1176 = vmatpush1.msra.mxu0 %v1139
    %1177 = vmatprep.subr.mxu0 0.0
    %1178 = vmatpush1.msra.mxu0 0.0
    %1179 = vmatprep.subr.mxu0 0.0
    %1180 = vmatpush1.msra.mxu0 0.0
    %1181 = vmatprep.subr.mxu0 0.0
    %1182 = vmatpush1.msra.mxu0 0.0
    %1183 = vmatprep.subr.mxu0 0.0
    %1184 = vmatpush1.msra.mxu0 0.0
    %1185 = vmatprep.subr.mxu0 0.0
    %1186 = vmatpush1.msra.mxu0 0.0
    %1187 = vmatprep.subr.mxu0 0.0
    %1188 = vmatpush1.msra.mxu0 0.0
    %1189 = vmatprep.subr.mxu0 0.0
    %1190 = vmatpush1.msra.mxu0 0.0
    %1191 = vmatprep.subr.mxu0 0.0
    %1192 = vmatpush1.msra.mxu0 0.0
    %1193 = vmatprep.subr.mxu0 0.0
    %1194 = vmatpush1.msra.mxu0 0.0
    %1195 = vmatprep.subr.mxu0 0.0
    %1196 = vmatpush1.msra.mxu0 0.0
    %1197 = vmatprep.subr.mxu0 0.0
    %1198 = vmatpush1.msra.mxu0 0.0
    %1199 = vmatprep.subr.mxu0 0.0
    %1200 = vmatpush1.msra.mxu0 0.0
    %1201 = vmatprep.subr.mxu0 0.0
    %1202 = vmatpush1.msra.mxu0 0.0
    %1203 = vmatprep.subr.mxu0 0.0
    %1204 = vmatpush1.msra.mxu0 0.0
    %1205 = vmatprep.subr.mxu0 0.0
    %1206 = vmatpush1.msra.mxu0 0.0
    %1207 = vmatprep.subr.mxu0 0.0
    %1208 = vmatpush1.msra.mxu0 0.0
    %1209 = vmatprep.mubr.f32.mxu0 0.0
    %1210 = vmatmul.mubr.f32.gmra.mrb[0].mxu0 %v1122
    %v1211 = vpop.f32.mrb[0].mxu0
    %v1212 = vadd.f32 %v1144, %v1211
    %v1213 = vpop.f32.mrb[0].mxu0
    %1214 = vmatprep.mubr.f32.mxu0 0.0
    %1215 = vmatmul.mubr.f32.gmra.mrb[0].mxu0 %v1123
    %v1216 = vpop.f32.mrb[0].mxu0
    %v1217 = vadd.f32 %v1144, %v1216
    %v1218 = vpop.f32.mrb[0].mxu0
    %1219 = vdwg.mxu0
    %v1220 = vld [vmem:[#allocation4 + $0x17] sm:$0x1]
    %v1221 = vsel %vm137, %v1212, 0.0
    %1222 = vadd.xlane.f32.xlu0 %v1221
    %v1223 = vpop.xlane.xlu0 %1222
    %v1224 = vsel %vm137, %v1217, 0.0
    %1225 = vadd.xlane.f32.xlu0 %v1224
    %v1226 = vpop.xlane.xlu0 %1225
    %v1227 = vmul.f32 %v1212, %v1212
    %v1228 = vmul.f32 %v1217, %v1217
    %v1229 = vsel %vm137, %v1227, 0.0
    %1230 = vadd.xlane.f32.xlu0 %v1229
    %v1231 = vpop.xlane.xlu0 %1230
    %v1232 = vsel %vm137, %v1228, 0.0
    %1233 = vadd.xlane.f32.xlu0 %v1232
    %v1234 = vpop.xlane.xlu0 %1233
    %v1235 = vmul.f32 %v1223, 0.015625
    %v1236 = vmul.f32 %v1226, 0.015625
    %v1237 = vmul.f32 %v1231, 0.015625
    %v1238 = vmul.f32 %v1234, 0.015625
    %v1239 = vmul.f32 %v1235, %v1235
    %v1240 = vmul.f32 %v1236, %v1236
    %v1241 = vsub.f32 %v1237, %v1239
    %v1242 = vsub.f32 %v1238, %v1240
    %v1243 = vsub.f32 %v1212, %v1235
    %v1244 = vsub.f32 %v1217, %v1236
    %v1245 = vadd.f32 %v1241, 1e-05
    %v1246 = vadd.f32 %v1242, 1e-05
    %v1247 = vrsqrt.pop %v1245
    %v1248 = vrsqrt.pop %v1246
    %v1249 = vmul.f32 %v1243, %v1247
    %v1250 = vmul.f32 %v1244, %v1248
    %v1251 = vlaneseq
    %v1252 = vshrl.u32 %v1251, 7
    %v1253 = vsub.s32 0, %v1252
    %v1254 = vrot.slane %v1220, %v1253
    %v1255 = vmul.f32 %v1249, %v1254
    %v1256 = vmul.f32 %v1250, %v1254
    %v1257 = vld [vmem:[#allocation4 + $0x1d] sm:$0x1]
    %v1258 = vlaneseq
    %v1259 = vshrl.u32 %v1258, 7
    %v1260 = vsub.s32 0, %v1259
    %v1261 = vrot.slane %v1257, %v1260
    %v1262 = vmul.f32 %v991, %v1261
    %v1263 = vmul.f32 %v992, %v1261
    %v1264 = vadd.f32 %v1262, %v1255
    %v1265 = vadd.f32 %v1263, %v1256
    %v1266 = vld [vmem:[#allocation4 + $0x148] sm:$0xff]
    %v1267 = vld [vmem:[#allocation4 + $0x150] sm:$0xff]
    %v1268 = vld [vmem:[#allocation4 + $0x158] sm:$0xff]
    %v1269 = vld [vmem:[#allocation4 + $0x160] sm:$0xff]
    %v1270 = vld [vmem:[#allocation4 + $0x168] sm:$0xff]
    %v1271 = vld [vmem:[#allocation4 + $0x170] sm:$0xff]
    %v1272 = vld [vmem:[#allocation4 + $0x178] sm:$0xff]
    %v1273 = vld [vmem:[#allocation4 + $0x180] sm:$0xff]
    %v1274 = vld [vmem:[#allocation4 + $0x6] sm:$0x1]
    %v1275 = vlaneseq
    %v1276 = vshrl.u32 %v1275, 7
    %v1277 = vsub.s32 0, %v1276
    %v1278 = vrot.slane %v1274, %v1277
    %v1280 = vsel %vm137, %v1264, 0
    %v1283 = vsel %vm137, %v1265, 0
    %1285 = vmatprep.subr.mxu0 0.0
    %1286 = vmatpush1.msra.mxu0 %v1266
    %1287 = vmatprep.subr.mxu0 0.0
    %1288 = vmatpush1.msra.mxu0 %v1267
    %1289 = vmatprep.subr.mxu0 0.0
    %1290 = vmatpush1.msra.mxu0 %v1268
    %1291 = vmatprep.subr.mxu0 0.0
    %1292 = vmatpush1.msra.mxu0 %v1269
    %1293 = vmatprep.subr.mxu0 0.0
    %1294 = vmatpush1.msra.mxu0 %v1270
    %1295 = vmatprep.subr.mxu0 0.0
    %1296 = vmatpush1.msra.mxu0 %v1271
    %1297 = vmatprep.subr.mxu0 0.0
    %1298 = vmatpush1.msra.mxu0 %v1272
    %1299 = vmatprep.subr.mxu0 0.0
    %1300 = vmatpush1.msra.mxu0 %v1273
    %1301 = vmatprep.subr.mxu0 0.0
    %1302 = vmatpush1.msra.mxu0 0.0
    %1303 = vmatprep.subr.mxu0 0.0
    %1304 = vmatpush1.msra.mxu0 0.0
    %1305 = vmatprep.subr.mxu0 0.0
    %1306 = vmatpush1.msra.mxu0 0.0
    %1307 = vmatprep.subr.mxu0 0.0
    %1308 = vmatpush1.msra.mxu0 0.0
    %1309 = vmatprep.subr.mxu0 0.0
    %1310 = vmatpush1.msra.mxu0 0.0
    %1311 = vmatprep.subr.mxu0 0.0
    %1312 = vmatpush1.msra.mxu0 0.0
    %1313 = vmatprep.subr.mxu0 0.0
    %1314 = vmatpush1.msra.mxu0 0.0
    %1315 = vmatprep.subr.mxu0 0.0
    %1316 = vmatpush1.msra.mxu0 0.0
    %1317 = vmatprep.subr.mxu0 0.0
    %1318 = vmatpush1.msra.mxu0 0.0
    %1319 = vmatprep.subr.mxu0 0.0
    %1320 = vmatpush1.msra.mxu0 0.0
    %1321 = vmatprep.subr.mxu0 0.0
    %1322 = vmatpush1.msra.mxu0 0.0
    %1323 = vmatprep.subr.mxu0 0.0
    %1324 = vmatpush1.msra.mxu0 0.0
    %1325 = vmatprep.subr.mxu0 0.0
    %1326 = vmatpush1.msra.mxu0 0.0
    %1327 = vmatprep.subr.mxu0 0.0
    %1328 = vmatpush1.msra.mxu0 0.0
    %1329 = vmatprep.subr.mxu0 0.0
    %1330 = vmatpush1.msra.mxu0 0.0
    %1331 = vmatprep.subr.mxu0 0.0
    %1332 = vmatpush1.msra.mxu0 0.0
    %1333 = vmatprep.subr.mxu0 0.0
    %1334 = vmatpush1.msra.mxu0 0.0
    %1335 = vmatprep.subr.mxu0 0.0
    %1336 = vmatpush1.msra.mxu0 0.0
    %1337 = vmatprep.subr.mxu0 0.0
    %1338 = vmatpush1.msra.mxu0 0.0
    %1339 = vmatprep.subr.mxu0 0.0
    %1340 = vmatpush1.msra.mxu0 0.0
    %1341 = vmatprep.subr.mxu0 0.0
    %1342 = vmatpush1.msra.mxu0 0.0
    %1343 = vmatprep.subr.mxu0 0.0
    %1344 = vmatpush1.msra.mxu0 0.0
    %1345 = vmatprep.subr.mxu0 0.0
    %1346 = vmatpush1.msra.mxu0 0.0
    %1347 = vmatprep.subr.mxu0 0.0
    %1348 = vmatpush1.msra.mxu0 0.0
    %1349 = vmatprep.mubr.f32.mxu0 0.0
    %1350 = vmatmul.mubr.f32.gmra.mrb[0].mxu0 %v1280
    %v1351 = vpop.f32.mrb[0].mxu0
    %v1352 = vadd.f32 %v1278, %v1351
    %v1353 = vpop.f32.mrb[0].mxu0
    %1354 = vmatprep.mubr.f32.mxu0 0.0
    %1355 = vmatmul.mubr.f32.gmra.mrb[0].mxu0 %v1283
    %v1356 = vpop.f32.mrb[0].mxu0
    %v1357 = vadd.f32 %v1278, %v1356
    %v1358 = vpop.f32.mrb[0].mxu0
    %1359 = vdwg.mxu0
    %v1360 = vmax.f32 %v1352, 0.0
    %v1361 = vmax.f32 %v1357, 0.0
    %v1362 = vmul.f32 %v1360, %v1360
    %v1363 = vmul.f32 %v1361, %v1361
    %v1364 = vld [vmem:[#allocation4 + $0xc] sm:$0x1]
    %1365 = vadd.xlane.f32.xlu0 %v1362
    %v1366 = vpop.xlane.xlu0 %1365
    %1367 = vadd.xlane.f32.xlu0 %v1363
    %v1368 = vpop.xlane.xlu0 %1367
    %v1369 = vmul.f32 %v1362, %v1362
    %v1370 = vmul.f32 %v1363, %v1363
    %1371 = vadd.xlane.f32.xlu0 %v1369
    %v1372 = vpop.xlane.xlu0 %1371
    %1373 = vadd.xlane.f32.xlu0 %v1370
    %v1374 = vpop.xlane.xlu0 %1373
    %v1375 = vmul.f32 %v1366, 0.0078125
    %v1376 = vmul.f32 %v1368, 0.0078125
    %v1377 = vmul.f32 %v1372, 0.0078125
    %v1378 = vmul.f32 %v1374, 0.0078125
    %v1379 = vmul.f32 %v1375, %v1375
    %v1380 = vmul.f32 %v1376, %v1376
    %v1381 = vsub.f32 %v1377, %v1379
    %v1382 = vsub.f32 %v1378, %v1380
    %v1383 = vsub.f32 %v1362, %v1375
    %v1384 = vsub.f32 %v1363, %v1376
    %v1385 = vadd.f32 %v1381, 1e-05
    %v1386 = vadd.f32 %v1382, 1e-05
    %v1387 = vrsqrt.pop %v1385
    %v1388 = vrsqrt.pop %v1386
    %v1389 = vmul.f32 %v1383, %v1387
    %v1390 = vmul.f32 %v1384, %v1388
    %v1391 = vlaneseq
    %v1392 = vshrl.u32 %v1391, 7
    %v1393 = vsub.s32 0, %v1392
    %v1394 = vrot.slane %v1364, %v1393
    %v1395 = vmul.f32 %v1389, %v1394
    %v1396 = vmul.f32 %v1390, %v1394
    %v1397 = vld [vmem:[#allocation4 + $0x3c8] sm:$0xff]
    %v1398 = vld [vmem:[#allocation4 + $0x3d0] sm:$0xff]
    %v1399 = vld [vmem:[#allocation4 + $0x3d8] sm:$0xff]
    %v1400 = vld [vmem:[#allocation4 + $0x3e0] sm:$0xff]
    %v1401 = vld [vmem:[#allocation4 + $0x3e8] sm:$0xff]
    %v1402 = vld [vmem:[#allocation4 + $0x3f0] sm:$0xff]
    %v1403 = vld [vmem:[#allocation4 + $0x3f8] sm:$0xff]
    %v1404 = vld [vmem:[#allocation4 + $0x400] sm:$0xff]
    %v1405 = vld [vmem:[#allocation4 + $0x408] sm:$0xff]
    %v1406 = vld [vmem:[#allocation4 + $0x410] sm:$0xff]
    %v1407 = vld [vmem:[#allocation4 + $0x418] sm:$0xff]
    %v1408 = vld [vmem:[#allocation4 + $0x420] sm:$0xff]
    %v1409 = vld [vmem:[#allocation4 + $0x428] sm:$0xff]
    %v1410 = vld [vmem:[#allocation4 + $0x430] sm:$0xff]
    %v1411 = vld [vmem:[#allocation4 + $0x438] sm:$0xff]
    %v1412 = vld [vmem:[#allocation4 + $0x440] sm:$0xff]
    %v1413 = vld [vmem:[#allocation4 + $0x12] sm:$0x1]
    %v1414 = vlaneseq
    %v1415 = vshrl.u32 %v1414, 7
    %v1416 = vsub.s32 0, %v1415
    %v1417 = vrot.slane %v1413, %v1416
    %1418 = vmatprep.subr.mxu0 0.0
    %1419 = vmatpush1.msra.mxu0 %v1397
    %1420 = vmatprep.subr.mxu0 0.0
    %1421 = vmatpush1.msra.mxu0 %v1398
    %1422 = vmatprep.subr.mxu0 0.0
    %1423 = vmatpush1.msra.mxu0 %v1399
    %1424 = vmatprep.subr.mxu0 0.0
    %1425 = vmatpush1.msra.mxu0 %v1400
    %1426 = vmatprep.subr.mxu0 0.0
    %1427 = vmatpush1.msra.mxu0 %v1401
    %1428 = vmatprep.subr.mxu0 0.0
    %1429 = vmatpush1.msra.mxu0 %v1402
    %1430 = vmatprep.subr.mxu0 0.0
    %1431 = vmatpush1.msra.mxu0 %v1403
    %1432 = vmatprep.subr.mxu0 0.0
    %1433 = vmatpush1.msra.mxu0 %v1404
    %1434 = vmatprep.subr.mxu0 0.0
    %1435 = vmatpush1.msra.mxu0 %v1405
    %1436 = vmatprep.subr.mxu0 0.0
    %1437 = vmatpush1.msra.mxu0 %v1406
    %1438 = vmatprep.subr.mxu0 0.0
    %1439 = vmatpush1.msra.mxu0 %v1407
    %1440 = vmatprep.subr.mxu0 0.0
    %1441 = vmatpush1.msra.mxu0 %v1408
    %1442 = vmatprep.subr.mxu0 0.0
    %1443 = vmatpush1.msra.mxu0 %v1409
    %1444 = vmatprep.subr.mxu0 0.0
    %1445 = vmatpush1.msra.mxu0 %v1410
    %1446 = vmatprep.subr.mxu0 0.0
    %1447 = vmatpush1.msra.mxu0 %v1411
    %1448 = vmatprep.subr.mxu0 0.0
    %1449 = vmatpush1.msra.mxu0 %v1412
    %1450 = vmatprep.subr.mxu0 0.0
    %1451 = vmatpush1.msra.mxu0 0.0
    %1452 = vmatprep.subr.mxu0 0.0
    %1453 = vmatpush1.msra.mxu0 0.0
    %1454 = vmatprep.subr.mxu0 0.0
    %1455 = vmatpush1.msra.mxu0 0.0
    %1456 = vmatprep.subr.mxu0 0.0
    %1457 = vmatpush1.msra.mxu0 0.0
    %1458 = vmatprep.subr.mxu0 0.0
    %1459 = vmatpush1.msra.mxu0 0.0
    %1460 = vmatprep.subr.mxu0 0.0
    %1461 = vmatpush1.msra.mxu0 0.0
    %1462 = vmatprep.subr.mxu0 0.0
    %1463 = vmatpush1.msra.mxu0 0.0
    %1464 = vmatprep.subr.mxu0 0.0
    %1465 = vmatpush1.msra.mxu0 0.0
    %1466 = vmatprep.subr.mxu0 0.0
    %1467 = vmatpush1.msra.mxu0 0.0
    %1468 = vmatprep.subr.mxu0 0.0
    %1469 = vmatpush1.msra.mxu0 0.0
    %1470 = vmatprep.subr.mxu0 0.0
    %1471 = vmatpush1.msra.mxu0 0.0
    %1472 = vmatprep.subr.mxu0 0.0
    %1473 = vmatpush1.msra.mxu0 0.0
    %1474 = vmatprep.subr.mxu0 0.0
    %1475 = vmatpush1.msra.mxu0 0.0
    %1476 = vmatprep.subr.mxu0 0.0
    %1477 = vmatpush1.msra.mxu0 0.0
    %1478 = vmatprep.subr.mxu0 0.0
    %1479 = vmatpush1.msra.mxu0 0.0
    %1480 = vmatprep.subr.mxu0 0.0
    %1481 = vmatpush1.msra.mxu0 0.0
    %1482 = vmatprep.mubr.f32.mxu0 0.0
    %1483 = vmatmul.mubr.f32.gmra.mrb[0].mxu0 %v1395
    %v1484 = vpop.f32.mrb[0].mxu0
    %v1485 = vadd.f32 %v1417, %v1484
    %v1486 = vpop.f32.mrb[0].mxu0
    %1487 = vmatprep.mubr.f32.mxu0 0.0
    %1488 = vmatmul.mubr.f32.gmra.mrb[0].mxu0 %v1396
    %v1489 = vpop.f32.mrb[0].mxu0
    %v1490 = vadd.f32 %v1417, %v1489
    %v1491 = vpop.f32.mrb[0].mxu0
    %1492 = vdwg.mxu0
    %v1493 = vld [vmem:[#allocation4 + $0x18] sm:$0x1]
    %v1494 = vsel %vm137, %v1485, 0.0
    %1495 = vadd.xlane.f32.xlu0 %v1494
    %v1496 = vpop.xlane.xlu0 %1495
    %v1497 = vsel %vm137, %v1490, 0.0
    %1498 = vadd.xlane.f32.xlu0 %v1497
    %v1499 = vpop.xlane.xlu0 %1498
    %v1500 = vmul.f32 %v1485, %v1485
    %v1501 = vmul.f32 %v1490, %v1490
    %v1502 = vsel %vm137, %v1500, 0.0
    %1503 = vadd.xlane.f32.xlu0 %v1502
    %v1504 = vpop.xlane.xlu0 %1503
    %v1505 = vsel %vm137, %v1501, 0.0
    %1506 = vadd.xlane.f32.xlu0 %v1505
    %v1507 = vpop.xlane.xlu0 %1506
    %v1508 = vmul.f32 %v1496, 0.015625
    %v1509 = vmul.f32 %v1499, 0.015625
    %v1510 = vmul.f32 %v1504, 0.015625
    %v1511 = vmul.f32 %v1507, 0.015625
    %v1512 = vmul.f32 %v1508, %v1508
    %v1513 = vmul.f32 %v1509, %v1509
    %v1514 = vsub.f32 %v1510, %v1512
    %v1515 = vsub.f32 %v1511, %v1513
    %v1516 = vsub.f32 %v1485, %v1508
    %v1517 = vsub.f32 %v1490, %v1509
    %v1518 = vadd.f32 %v1514, 1e-05
    %v1519 = vadd.f32 %v1515, 1e-05
    %v1520 = vrsqrt.pop %v1518
    %v1521 = vrsqrt.pop %v1519
    %v1522 = vmul.f32 %v1516, %v1520
    %v1523 = vmul.f32 %v1517, %v1521
    %v1524 = vlaneseq
    %v1525 = vshrl.u32 %v1524, 7
    %v1526 = vsub.s32 0, %v1525
    %v1527 = vrot.slane %v1493, %v1526
    %v1528 = vmul.f32 %v1522, %v1527
    %v1529 = vmul.f32 %v1523, %v1527
    %v1530 = vld [vmem:[#allocation4 + $0x1e] sm:$0x1]
    %v1531 = vlaneseq
    %v1532 = vshrl.u32 %v1531, 7
    %v1533 = vsub.s32 0, %v1532
    %v1534 = vrot.slane %v1530, %v1533
    %v1535 = vmul.f32 %v1264, %v1534
    %v1536 = vmul.f32 %v1265, %v1534
    %v1537 = vadd.f32 %v1535, %v1528
    %v1538 = vadd.f32 %v1536, %v1529
    %v1539 = vld [vmem:[#allocation4 + $0x188] sm:$0xff]
    %v1540 = vld [vmem:[#allocation4 + $0x190] sm:$0xff]
    %v1541 = vld [vmem:[#allocation4 + $0x198] sm:$0xff]
    %v1542 = vld [vmem:[#allocation4 + $0x1a0] sm:$0xff]
    %v1543 = vld [vmem:[#allocation4 + $0x1a8] sm:$0xff]
    %v1544 = vld [vmem:[#allocation4 + $0x1b0] sm:$0xff]
    %v1545 = vld [vmem:[#allocation4 + $0x1b8] sm:$0xff]
    %v1546 = vld [vmem:[#allocation4 + $0x1c0] sm:$0xff]
    %v1547 = vld [vmem:[#allocation4 + $0x7] sm:$0x1]
    %v1548 = vlaneseq
    %v1549 = vshrl.u32 %v1548, 7
    %v1550 = vsub.s32 0, %v1549
    %v1551 = vrot.slane %v1547, %v1550
    %v1553 = vsel %vm137, %v1537, 0
    %v1556 = vsel %vm137, %v1538, 0
    %1558 = vmatprep.subr.mxu0 0.0
    %1559 = vmatpush1.msra.mxu0 %v1539
    %1560 = vmatprep.subr.mxu0 0.0
    %1561 = vmatpush1.msra.mxu0 %v1540
    %1562 = vmatprep.subr.mxu0 0.0
    %1563 = vmatpush1.msra.mxu0 %v1541
    %1564 = vmatprep.subr.mxu0 0.0
    %1565 = vmatpush1.msra.mxu0 %v1542
    %1566 = vmatprep.subr.mxu0 0.0
    %1567 = vmatpush1.msra.mxu0 %v1543
    %1568 = vmatprep.subr.mxu0 0.0
    %1569 = vmatpush1.msra.mxu0 %v1544
    %1570 = vmatprep.subr.mxu0 0.0
    %1571 = vmatpush1.msra.mxu0 %v1545
    %1572 = vmatprep.subr.mxu0 0.0
    %1573 = vmatpush1.msra.mxu0 %v1546
    %1574 = vmatprep.subr.mxu0 0.0
    %1575 = vmatpush1.msra.mxu0 0.0
    %1576 = vmatprep.subr.mxu0 0.0
    %1577 = vmatpush1.msra.mxu0 0.0
    %1578 = vmatprep.subr.mxu0 0.0
    %1579 = vmatpush1.msra.mxu0 0.0
    %1580 = vmatprep.subr.mxu0 0.0
    %1581 = vmatpush1.msra.mxu0 0.0
    %1582 = vmatprep.subr.mxu0 0.0
    %1583 = vmatpush1.msra.mxu0 0.0
    %1584 = vmatprep.subr.mxu0 0.0
    %1585 = vmatpush1.msra.mxu0 0.0
    %1586 = vmatprep.subr.mxu0 0.0
    %1587 = vmatpush1.msra.mxu0 0.0
    %1588 = vmatprep.subr.mxu0 0.0
    %1589 = vmatpush1.msra.mxu0 0.0
    %1590 = vmatprep.subr.mxu0 0.0
    %1591 = vmatpush1.msra.mxu0 0.0
    %1592 = vmatprep.subr.mxu0 0.0
    %1593 = vmatpush1.msra.mxu0 0.0
    %1594 = vmatprep.subr.mxu0 0.0
    %1595 = vmatpush1.msra.mxu0 0.0
    %1596 = vmatprep.subr.mxu0 0.0
    %1597 = vmatpush1.msra.mxu0 0.0
    %1598 = vmatprep.subr.mxu0 0.0
    %1599 = vmatpush1.msra.mxu0 0.0
    %1600 = vmatprep.subr.mxu0 0.0
    %1601 = vmatpush1.msra.mxu0 0.0
    %1602 = vmatprep.subr.mxu0 0.0
    %1603 = vmatpush1.msra.mxu0 0.0
    %1604 = vmatprep.subr.mxu0 0.0
    %1605 = vmatpush1.msra.mxu0 0.0
    %1606 = vmatprep.subr.mxu0 0.0
    %1607 = vmatpush1.msra.mxu0 0.0
    %1608 = vmatprep.subr.mxu0 0.0
    %1609 = vmatpush1.msra.mxu0 0.0
    %1610 = vmatprep.subr.mxu0 0.0
    %1611 = vmatpush1.msra.mxu0 0.0
    %1612 = vmatprep.subr.mxu0 0.0
    %1613 = vmatpush1.msra.mxu0 0.0
    %1614 = vmatprep.subr.mxu0 0.0
    %1615 = vmatpush1.msra.mxu0 0.0
    %1616 = vmatprep.subr.mxu0 0.0
    %1617 = vmatpush1.msra.mxu0 0.0
    %1618 = vmatprep.subr.mxu0 0.0
    %1619 = vmatpush1.msra.mxu0 0.0
    %1620 = vmatprep.subr.mxu0 0.0
    %1621 = vmatpush1.msra.mxu0 0.0
    %1622 = vmatprep.mubr.f32.mxu0 0.0
    %1623 = vmatmul.mubr.f32.gmra.mrb[0].mxu0 %v1553
    %v1624 = vpop.f32.mrb[0].mxu0
    %v1625 = vadd.f32 %v1551, %v1624
    %v1626 = vpop.f32.mrb[0].mxu0
    %1627 = vmatprep.mubr.f32.mxu0 0.0
    %1628 = vmatmul.mubr.f32.gmra.mrb[0].mxu0 %v1556
    %v1629 = vpop.f32.mrb[0].mxu0
    %v1630 = vadd.f32 %v1551, %v1629
    %v1631 = vpop.f32.mrb[0].mxu0
    %1632 = vdwg.mxu0
    %v1633 = vmax.f32 %v1625, 0.0
    %v1634 = vmax.f32 %v1630, 0.0
    %v1635 = vmul.f32 %v1633, %v1633
    %v1636 = vmul.f32 %v1634, %v1634
    %v1637 = vld [vmem:[#allocation4 + $0xd] sm:$0x1]
    %1638 = vadd.xlane.f32.xlu0 %v1635
    %v1639 = vpop.xlane.xlu0 %1638
    %1640 = vadd.xlane.f32.xlu0 %v1636
    %v1641 = vpop.xlane.xlu0 %1640
    %v1642 = vmul.f32 %v1635, %v1635
    %v1643 = vmul.f32 %v1636, %v1636
    %1644 = vadd.xlane.f32.xlu0 %v1642
    %v1645 = vpop.xlane.xlu0 %1644
    %1646 = vadd.xlane.f32.xlu0 %v1643
    %v1647 = vpop.xlane.xlu0 %1646
    %v1648 = vmul.f32 %v1639, 0.0078125
    %v1649 = vmul.f32 %v1641, 0.0078125
    %v1650 = vmul.f32 %v1645, 0.0078125
    %v1651 = vmul.f32 %v1647, 0.0078125
    %v1652 = vmul.f32 %v1648, %v1648
    %v1653 = vmul.f32 %v1649, %v1649
    %v1654 = vsub.f32 %v1650, %v1652
    %v1655 = vsub.f32 %v1651, %v1653
    %v1656 = vsub.f32 %v1635, %v1648
    %v1657 = vsub.f32 %v1636, %v1649
    %v1658 = vadd.f32 %v1654, 1e-05
    %v1659 = vadd.f32 %v1655, 1e-05
    %v1660 = vrsqrt.pop %v1658
    %v1661 = vrsqrt.pop %v1659
    %v1662 = vmul.f32 %v1656, %v1660
    %v1663 = vmul.f32 %v1657, %v1661
    %v1664 = vlaneseq
    %v1665 = vshrl.u32 %v1664, 7
    %v1666 = vsub.s32 0, %v1665
    %v1667 = vrot.slane %v1637, %v1666
    %v1668 = vmul.f32 %v1662, %v1667
    %v1669 = vmul.f32 %v1663, %v1667
    %v1670 = vld [vmem:[#allocation4 + $0x448] sm:$0xff]
    %v1671 = vld [vmem:[#allocation4 + $0x450] sm:$0xff]
    %v1672 = vld [vmem:[#allocation4 + $0x458] sm:$0xff]
    %v1673 = vld [vmem:[#allocation4 + $0x460] sm:$0xff]
    %v1674 = vld [vmem:[#allocation4 + $0x468] sm:$0xff]
    %v1675 = vld [vmem:[#allocation4 + $0x470] sm:$0xff]
    %v1676 = vld [vmem:[#allocation4 + $0x478] sm:$0xff]
    %v1677 = vld [vmem:[#allocation4 + $0x480] sm:$0xff]
    %v1678 = vld [vmem:[#allocation4 + $0x488] sm:$0xff]
    %v1679 = vld [vmem:[#allocation4 + $0x490] sm:$0xff]
    %v1680 = vld [vmem:[#allocation4 + $0x498] sm:$0xff]
    %v1681 = vld [vmem:[#allocation4 + $0x4a0] sm:$0xff]
    %v1682 = vld [vmem:[#allocation4 + $0x4a8] sm:$0xff]
    %v1683 = vld [vmem:[#allocation4 + $0x4b0] sm:$0xff]
    %v1684 = vld [vmem:[#allocation4 + $0x4b8] sm:$0xff]
    %v1685 = vld [vmem:[#allocation4 + $0x4c0] sm:$0xff]
    %v1686 = vld [vmem:[#allocation4 + $0x13] sm:$0x1]
    %v1687 = vlaneseq
    %v1688 = vshrl.u32 %v1687, 7
    %v1689 = vsub.s32 0, %v1688
    %v1690 = vrot.slane %v1686, %v1689
    %1691 = vmatprep.subr.mxu0 0.0
    %1692 = vmatpush1.msra.mxu0 %v1670
    %1693 = vmatprep.subr.mxu0 0.0
    %1694 = vmatpush1.msra.mxu0 %v1671
    %1695 = vmatprep.subr.mxu0 0.0
    %1696 = vmatpush1.msra.mxu0 %v1672
    %1697 = vmatprep.subr.mxu0 0.0
    %1698 = vmatpush1.msra.mxu0 %v1673
    %1699 = vmatprep.subr.mxu0 0.0
    %1700 = vmatpush1.msra.mxu0 %v1674
    %1701 = vmatprep.subr.mxu0 0.0
    %1702 = vmatpush1.msra.mxu0 %v1675
    %1703 = vmatprep.subr.mxu0 0.0
    %1704 = vmatpush1.msra.mxu0 %v1676
    %1705 = vmatprep.subr.mxu0 0.0
    %1706 = vmatpush1.msra.mxu0 %v1677
    %1707 = vmatprep.subr.mxu0 0.0
    %1708 = vmatpush1.msra.mxu0 %v1678
    %1709 = vmatprep.subr.mxu0 0.0
    %1710 = vmatpush1.msra.mxu0 %v1679
    %1711 = vmatprep.subr.mxu0 0.0
    %1712 = vmatpush1.msra.mxu0 %v1680
    %1713 = vmatprep.subr.mxu0 0.0
    %1714 = vmatpush1.msra.mxu0 %v1681
    %1715 = vmatprep.subr.mxu0 0.0
    %1716 = vmatpush1.msra.mxu0 %v1682
    %1717 = vmatprep.subr.mxu0 0.0
    %1718 = vmatpush1.msra.mxu0 %v1683
    %1719 = vmatprep.subr.mxu0 0.0
    %1720 = vmatpush1.msra.mxu0 %v1684
    %1721 = vmatprep.subr.mxu0 0.0
    %1722 = vmatpush1.msra.mxu0 %v1685
    %1723 = vmatprep.subr.mxu0 0.0
    %1724 = vmatpush1.msra.mxu0 0.0
    %1725 = vmatprep.subr.mxu0 0.0
    %1726 = vmatpush1.msra.mxu0 0.0
    %1727 = vmatprep.subr.mxu0 0.0
    %1728 = vmatpush1.msra.mxu0 0.0
    %1729 = vmatprep.subr.mxu0 0.0
    %1730 = vmatpush1.msra.mxu0 0.0
    %1731 = vmatprep.subr.mxu0 0.0
    %1732 = vmatpush1.msra.mxu0 0.0
    %1733 = vmatprep.subr.mxu0 0.0
    %1734 = vmatpush1.msra.mxu0 0.0
    %1735 = vmatprep.subr.mxu0 0.0
    %1736 = vmatpush1.msra.mxu0 0.0
    %1737 = vmatprep.subr.mxu0 0.0
    %1738 = vmatpush1.msra.mxu0 0.0
    %1739 = vmatprep.subr.mxu0 0.0
    %1740 = vmatpush1.msra.mxu0 0.0
    %1741 = vmatprep.subr.mxu0 0.0
    %1742 = vmatpush1.msra.mxu0 0.0
    %1743 = vmatprep.subr.mxu0 0.0
    %1744 = vmatpush1.msra.mxu0 0.0
    %1745 = vmatprep.subr.mxu0 0.0
    %1746 = vmatpush1.msra.mxu0 0.0
    %1747 = vmatprep.subr.mxu0 0.0
    %1748 = vmatpush1.msra.mxu0 0.0
    %1749 = vmatprep.subr.mxu0 0.0
    %1750 = vmatpush1.msra.mxu0 0.0
    %1751 = vmatprep.subr.mxu0 0.0
    %1752 = vmatpush1.msra.mxu0 0.0
    %1753 = vmatprep.subr.mxu0 0.0
    %1754 = vmatpush1.msra.mxu0 0.0
    %1755 = vmatprep.mubr.f32.mxu0 0.0
    %1756 = vmatmul.mubr.f32.gmra.mrb[0].mxu0 %v1668
    %v1757 = vpop.f32.mrb[0].mxu0
    %v1758 = vadd.f32 %v1690, %v1757
    %v1759 = vpop.f32.mrb[0].mxu0
    %1760 = vmatprep.mubr.f32.mxu0 0.0
    %1761 = vmatmul.mubr.f32.gmra.mrb[0].mxu0 %v1669
    %v1762 = vpop.f32.mrb[0].mxu0
    %v1763 = vadd.f32 %v1690, %v1762
    %v1764 = vpop.f32.mrb[0].mxu0
    %1765 = vdwg.mxu0
    %v1766 = vld [vmem:[#allocation4 + $0x19] sm:$0x1]
    %v1767 = vsel %vm137, %v1758, 0.0
    %1768 = vadd.xlane.f32.xlu0 %v1767
    %v1769 = vpop.xlane.xlu0 %1768
    %v1770 = vsel %vm137, %v1763, 0.0
    %1771 = vadd.xlane.f32.xlu0 %v1770
    %v1772 = vpop.xlane.xlu0 %1771
    %v1773 = vmul.f32 %v1758, %v1758
    %v1774 = vmul.f32 %v1763, %v1763
    %v1775 = vsel %vm137, %v1773, 0.0
    %1776 = vadd.xlane.f32.xlu0 %v1775
    %v1777 = vpop.xlane.xlu0 %1776
    %v1778 = vsel %vm137, %v1774, 0.0
    %1779 = vadd.xlane.f32.xlu0 %v1778
    %v1780 = vpop.xlane.xlu0 %1779
    %v1781 = vmul.f32 %v1769, 0.015625
    %v1782 = vmul.f32 %v1772, 0.015625
    %v1783 = vmul.f32 %v1777, 0.015625
    %v1784 = vmul.f32 %v1780, 0.015625
    %v1785 = vmul.f32 %v1781, %v1781
    %v1786 = vmul.f32 %v1782, %v1782
    %v1787 = vsub.f32 %v1783, %v1785
    %v1788 = vsub.f32 %v1784, %v1786
    %v1789 = vsub.f32 %v1758, %v1781
    %v1790 = vsub.f32 %v1763, %v1782
    %v1791 = vadd.f32 %v1787, 1e-05
    %v1792 = vadd.f32 %v1788, 1e-05
    %v1793 = vrsqrt.pop %v1791
    %v1794 = vrsqrt.pop %v1792
    %v1795 = vmul.f32 %v1789, %v1793
    %v1796 = vmul.f32 %v1790, %v1794
    %v1797 = vlaneseq
    %v1798 = vshrl.u32 %v1797, 7
    %v1799 = vsub.s32 0, %v1798
    %v1800 = vrot.slane %v1766, %v1799
    %v1801 = vmul.f32 %v1795, %v1800
    %v1802 = vmul.f32 %v1796, %v1800
    %v1803 = vld [vmem:[#allocation4 + $0x1f] sm:$0x1]
    %v1804 = vlaneseq
    %v1805 = vshrl.u32 %v1804, 7
    %v1806 = vsub.s32 0, %v1805
    %v1807 = vrot.slane %v1803, %v1806
    %v1808 = vmul.f32 %v1537, %v1807
    %v1809 = vmul.f32 %v1538, %v1807
    %v1810 = vadd.f32 %v1808, %v1801
    %v1811 = vadd.f32 %v1809, %v1802
    %v1812 = vld [vmem:[#allocation4 + $0x20] sm:$0x1]
    %v1813 = vld [vmem:[#allocation4 + $0x21] sm:$0x1]
    %v1814 = vlaneseq
    %v1815 = vshrl.u32 %v1814, 7
    %v1816 = vsub.s32 0, %v1815
    %v1817 = vrot.slane %v1812, %v1816
    %v1818 = vmul.f32 %v1810, %v1817
    %v1819 = vmul.f32 %v1811, %v1817
    %v1820 = vsel %vm137, %v1818, 0.0
    %1821 = vadd.xlane.f32.xlu0 %v1820
    %v1822 = vpop.xlane.xlu0 %1821
    %v1823 = vsel %vm137, %v1819, 0.0
    %1824 = vadd.xlane.f32.xlu0 %v1823
    %v1825 = vpop.xlane.xlu0 %1824
    %v1826 = vlaneseq
    %v1827 = vshrl.u32 %v1826, 7
    %v1828 = vsub.s32 0, %v1827
    %v1829 = vrot.slane %v1813, %v1828
    %v1830 = vadd.f32 %v1822, %v1829
    %v1831 = vadd.f32 %v1825, %v1829
    %vm1832 = vcmask 7168
    %1833 = vst.msk [vmem:[%s2] sm:$0xff] %vm1832, %v1830
    %1834 = vst.msk [vmem:[%s2 + $0x8] sm:$0xff] %vm1832, %v1831
    // Predicated region
    $region18: #{tpu_custom_call.1} parent=1 // pred_check
      _
    $region19: #{tpu_custom_call.1} parent=1 // pred_check_branch
      %1836 = sbr.rel (0) target = $region21
    $region20: #{tpu_custom_call.1} parent=1 // pred_region
      _
    $region21: #{tpu_custom_call.1} parent=1 // pred_fallthru
      _
    // Predicated region
    $region22: #{tpu_custom_call.1} parent=1 // pred_check
      _
    $region23: #{tpu_custom_call.1} parent=1 // pred_check_branch
      %1838 = sbr.rel (0) target = $region25
    $region24: #{tpu_custom_call.1} parent=1 // pred_region
      _
    $region25: #{tpu_custom_call.1} parent=1 // pred_fallthru
      _
    %1839 = vsyncpa [#allocation3], 1
    %1840 = vsyncpa [#allocation5], 1

</llo_original>
